<compile_context>
chip_gen: v7x
topology: tpu7x:2x2x1
jax: 0.10.0
libtpu: 0.0.40
codegen_flags: <defaults>
</compile_context>

<pallas_src>
import functools
import math
import numpy as np
import jax
import jax.numpy as jnp
from jax import lax
from jax.experimental import pallas as pl
from jax.experimental.pallas import tpu as pltpu

F32 = jnp.float32
BF16 = jnp.bfloat16


# ----------------------------- in-kernel helpers -----------------------------

def _layer_norm(x, gamma, beta, eps=1e-5):
    mu = jnp.mean(x, axis=-1, keepdims=True)
    var = jnp.mean((x - mu) ** 2, axis=-1, keepdims=True)
    return (x - mu) * lax.rsqrt(var + eps) * gamma + beta


def _mm_nt(a, b):
    """a:(M,K), b:(N,K) -> a @ b.T with f32 accumulation (MXU)."""
    return lax.dot_general(a, b, (((1,), (1,)), ((), ())),
                           preferred_element_type=F32)


def _gate(x, y, wu_t, ug_t, bvec):
    """GRU-style gate (same math as the previously approved version).
    wu_t is the fused, pre-transposed (D, 5D) = [W; U]^T projection of y."""
    D = x.shape[-1]
    proj = jnp.dot(y.astype(BF16), wu_t, preferred_element_type=F32)     # (T, 5D)
    wr, wz, wg = proj[:, :D], proj[:, D:2 * D], proj[:, 2 * D:3 * D]
    ur, uz = proj[:, 3 * D:4 * D], proj[:, 4 * D:]
    r = jax.nn.sigmoid(wr + ur)
    z = jax.nn.sigmoid(wz + uz - bvec)
    hcand = jnp.tanh(wg + jnp.dot((r * x).astype(BF16), ug_t,
                                  preferred_element_type=F32))
    return (1.0 - z) * x + z * hcand


# --------------------------------- the kernel --------------------------------

def _gated_attention_kernel(M, mask_shift_len, NH, DH,
                            h_ref, cq_ref, ck_ref, e1_ref, e2_ref, f1t_ref, f2t_ref,
                            lnw_g_ref, lnw_b_ref, wqk_ref, kbias_ref, rbias_ref,
                            wr_ref,
                            lnv_g_ref, lnv_b_ref, wv_ref, wo_ref,
                            g1_wu_ref, g1_ug_ref, g1_b_ref,
                            lnf_g_ref, lnf_b_ref, wff_ref, bff_ref,
                            g2_wu_ref, g2_ug_ref, g2_b_ref,
                            out_ref, summary_ref):
    T, D = h_ref.shape[1], h_ref.shape[2]
    TM = ck_ref.shape[2]
    NHDH = NH * DH
    scale = 1.0 / math.sqrt(DH)

    h = h_ref[0]                                  # (T, D) f32
    cq = cq_ref[0]                                # (T, 1)  int32 reset-cumsum (query)
    ck = ck_ref[0]                                # (1, TM) int32 reset-cumsum (key)

    # ---- attention mask rebuilt in-kernel (no (B, T, TM) f32 mask from HBM) ----
    qi = lax.broadcasted_iota(jnp.int32, (T, TM), 0)
    kj = lax.broadcasted_iota(jnp.int32, (T, TM), 1)
    future = kj >= qi + M                          # triu(ones, M + future)
    history = kj <= qi - mask_shift_len            # tril(ones, -mask_shift_len)
    resetm = ((cq - ck) > 0) & (kj < qi)           # ResetMasker (M == 0 fresh state)
    masked = future | history | resetm             # (T, TM) bool, True == masked
    any_valid = jnp.max(jnp.where(masked, 0.0, 1.0), axis=-1, keepdims=True)

    # ---- dense projections (keys/values come from the same T rows, M == 0) ----
    lnw = _layer_norm(h, lnw_g_ref[...], lnw_b_ref[...]).astype(BF16)   # Weights.norm
    lnv = _layer_norm(h, lnv_g_ref[...], lnv_b_ref[...]).astype(BF16)   # Values.norm
    qk = jnp.dot(lnw, wqk_ref[...], preferred_element_type=F32)         # (T, 2*NHDH)
    q, k = qk[:, :NHDH], qk[:, NHDH:]
    v = jnp.dot(lnv, wv_ref[...], preferred_element_type=F32)           # (TM, NH*DH)

    # biases added to all heads at once; bf16 casts hoisted out of the head loop
    q_kb = (q + kbias_ref[...]).astype(BF16)       # (T, NH*DH)
    q_rb = (q + rbias_ref[...]).astype(BF16)       # (T, NH*DH)
    k_bf = k.astype(BF16)
    v_bf = v.astype(BF16)
    wr = wr_ref[...]                               # (NH*DH, D) bf16 (torch layout)
    e1, e2 = e1_ref[...], e2_ref[...]              # (T, D) f32 query-side trig
    f1t, f2t = f1t_ref[...], f2t_ref[...]          # (D, TM) bf16 key-side trig

    for n in range(NH):                            # static, small head loop
        sl = slice(n * DH, (n + 1) * DH)

        # content score: (q + k_bias) @ k^T on the MXU
        cs = _mm_nt(q_kb[:, sl], k_bf[:, sl])                                # (T, TM)

        # position score, rel-shift folded analytically:
        #   ps[i, j] = (q_i + r_bias) . Wr emb(M + i - j)
        #            = ((qr @ Wr) * E1[i]) . F1[j] + ((qr @ Wr) * E2[i]) . F2[j]
        u = jnp.dot(q_rb[:, sl], wr[sl, :], preferred_element_type=F32)      # (T, D)
        ps = (jnp.dot((u * e1).astype(BF16), f1t, preferred_element_type=F32) +
              jnp.dot((u * e2).astype(BF16), f2t, preferred_element_type=F32))

        score = (cs + ps) * scale
        score = jnp.clip(jnp.where(masked, -65000.0, score), -65000.0, 65000.0)

        # softmax over the key axis (f32), EUP reciprocal for the denominator
        mrow = jnp.max(score, axis=-1, keepdims=True)
        e = jnp.exp(score - mrow)
        prob = e * pl.reciprocal(jnp.sum(e, axis=-1, keepdims=True), approx=True)
        prob = prob * any_valid                    # zero fully-masked rows

        # summary: prob @ v, written into lane-slab scratch (no concatenate)
        summary_ref[:, sl] = jnp.dot(prob.astype(BF16), v_bf[:, sl],
                                     preferred_element_type=F32)

    # Values: relu(o(summary)), then attn gate, FF, ff gate
    a = jnp.maximum(jnp.dot(summary_ref[...].astype(BF16), wo_ref[...],
                            preferred_element_type=F32), 0.0)
    h1 = _gate(h, a, g1_wu_ref[...], g1_ug_ref[...], g1_b_ref[...])
    lnf = _layer_norm(h1, lnf_g_ref[...], lnf_b_ref[...]).astype(BF16)
    ff = jnp.maximum(jnp.dot(lnf, wff_ref[...], preferred_element_type=F32)
                     + bff_ref[...], 0.0)
    h2 = _gate(h1, ff, g2_wu_ref[...], g2_ug_ref[...], g2_b_ref[...])
    out_ref[0] = h2


def gated_attention_layer(h_btd, cq, ck, e1, e2, f1t, f2t, p, *, M, mask_shift_len):
    B, T, D = h_btd.shape
    TM = ck.shape[2]
    NH, DH = p['n_head'], p['d_head']

    weights = [p['lnw_g'], p['lnw_b'], p['wqkT'], p['k_bias_row'], p['r_bias_row'],
               p['wr'],
               p['lnv_g'], p['lnv_b'], p['wvT'], p['woT'],
               p['g1_wuT'], p['g1_ugT'], p['g1_b'],
               p['lnf_g'], p['lnf_b'], p['wffT'], p['bff'],
               p['g2_wuT'], p['g2_ugT'], p['g2_b']]

    in_specs = ([pl.BlockSpec((1, T, D), lambda b: (b, 0, 0)),
                 pl.BlockSpec((1, T, 1), lambda b: (b, 0, 0)),
                 pl.BlockSpec((1, 1, TM), lambda b: (b, 0, 0)),
                 pl.BlockSpec(e1.shape, lambda b: (0, 0)),
                 pl.BlockSpec(e2.shape, lambda b: (0, 0)),
                 pl.BlockSpec(f1t.shape, lambda b: (0, 0)),
                 pl.BlockSpec(f2t.shape, lambda b: (0, 0))]
                + [pl.BlockSpec(w.shape, lambda b: (0, 0)) for w in weights])

    kernel = functools.partial(_gated_attention_kernel, M, mask_shift_len, NH, DH)
    return pl.pallas_call(
        kernel,
        out_shape=jax.ShapeDtypeStruct((B, T, D), jnp.float32),
        grid=(B,),
        in_specs=in_specs,
        out_specs=pl.BlockSpec((1, T, D), lambda b: (b, 0, 0)),
        scratch_shapes=[pltpu.VMEM((T, NH * DH), jnp.float32)],
        compiler_params=pltpu.CompilerParams(
            dimension_semantics=("parallel",),
            vmem_limit_bytes=32 * 1024 * 1024),
    )(h_btd, cq, ck, e1, e2, f1t, f2t, *weights)


# ----------------------------- plain-JAX glue --------------------------------

def _pos_factors(T, M, TM, D, lim=1024.0):
    """Angle-addition factorization of the rel-shifted positional embedding:
    emb(M+i-j) = E1[i]*F1[j] + E2[i]*F2[j] elementwise over the D sin/cos features.
    Exact on every unmasked (i, j); masked positions are overwritten before softmax."""
    omega = 2.0 * np.pi / (lim ** (np.arange(0.0, D, 2.0) / D))             # (D/2,)
    qpos = (M + np.arange(T, dtype=np.float64))[:, None] * omega[None, :]   # (T, D/2)
    kpos = np.arange(TM, dtype=np.float64)[:, None] * omega[None, :]        # (TM, D/2)
    e1 = np.concatenate([np.sin(qpos), np.cos(qpos)], axis=-1)              # (T, D)
    e2 = np.concatenate([-np.cos(qpos), np.sin(qpos)], axis=-1)             # (T, D)
    f1 = np.concatenate([np.cos(kpos), np.cos(kpos)], axis=-1)              # (TM, D)
    f2 = np.concatenate([np.sin(kpos), np.sin(kpos)], axis=-1)              # (TM, D)
    return (jnp.asarray(e1, jnp.float32), jnp.asarray(e2, jnp.float32),
            jnp.asarray(f1.T, BF16), jnp.asarray(f2.T, BF16))


def _prep_layer_params(p):
    """Host-side parameter preprocessing: pre-transpose to (in, out), fuse Q/K into
    one (D, 2*NH*DH) projection, fuse the two Gate projections into one (D, 5D)
    weight, flatten the attention biases, cast matmul weights to bf16."""
    NH, DH = p['k_bias'].shape
    b16 = lambda w: jnp.asarray(w, BF16)
    return dict(
        n_head=int(NH), d_head=int(DH),
        lnw_g=p['lnw_g'], lnw_b=p['lnw_b'],
        wqkT=b16(jnp.concatenate([p['wq'], p['wk']], axis=0).T),         # (D, 2*NHDH)
        k_bias_row=jnp.asarray(p['k_bias'], F32).reshape(1, -1),         # (1, NHDH)
        r_bias_row=jnp.asarray(p['r_bias'], F32).reshape(1, -1),         # (1, NHDH)
        wr=b16(p['wr']),                                    # (NH*DH, D): used as qr @ Wr
        lnv_g=p['lnv_g'], lnv_b=p['lnv_b'],
        wvT=b16(p['wv'].T), woT=b16(p['wo'].T),
        g1_wuT=b16(jnp.concatenate([p['g1_W'], p['g1_U']], axis=0).T),   # (D, 5D)
        g1_ugT=b16(p['g1_Ug'].T), g1_b=p['g1_b'],
        lnf_g=p['lnf_g'], lnf_b=p['lnf_b'],
        wffT=b16(p['wff'].T), bff=p['bff'],
        g2_wuT=b16(jnp.concatenate([p['g2_W'], p['g2_U']], axis=0).T),
        g2_ugT=b16(p['g2_Ug'].T), g2_b=p['g2_b'],
    )


def transformer_forward(h, reset, layer_params, *, mem_len):
    """h: (T, B, D) or (B, D); reset: (T, B) / (B,) bool."""
    if h.ndim == 2:
        return transformer_forward(h[None], reset[None], layer_params,
                                   mem_len=mem_len)[0]
    T, B, D = h.shape
    M = 0                                  # fresh recurrent state -> empty memory
    TM = T + M
    mask_len = M + T - mem_len
    mask_shift_len = T - mask_len if mask_len > 0 else T

    cum = jnp.cumsum(reset.astype(jnp.int32), axis=0)        # (T, B)
    cum_bt = jnp.transpose(cum, (1, 0))                      # (B, T)
    cq = cum_bt[:, :, None]                                  # (B, T, 1)
    ck = cum_bt[:, None, :]                                  # (B, 1, TM)  (M == 0)

    e1, e2, f1t, f2t = _pos_factors(T, M, TM, D)
    prepped = [_prep_layer_params(p) for p in layer_params]

    h_btd = jnp.transpose(h, (1, 0, 2)).astype(jnp.float32)  # kernel layout (B, T, D)
    for p in prepped:
        h_btd = gated_attention_layer(h_btd, cq, ck, e1, e2, f1t, f2t, p,
                                      M=M, mask_shift_len=mask_shift_len)
    return jnp.transpose(h_btd, (1, 0, 2))


# --------------------------- deterministic init -------------------------------

def init_layer_params(key, d_model, n_head, d_head):
    NHDH = n_head * d_head
    ks = jax.random.split(key, 16)

    def lin(k, out_f, in_f):
        bound = 1.0 / np.sqrt(in_f)
        return jax.random.uniform(k, (out_f, in_f), jnp.float32, -bound, bound)

    ones = jnp.ones((1, d_model), jnp.float32)
    zeros = jnp.zeros((1, d_model), jnp.float32)
    return dict(
        lnw_g=ones, lnw_b=zeros,                          # Weights.norm
        wq=lin(ks[0], NHDH, d_model),
        wk=lin(ks[1], NHDH, d_model),
        k_bias=jax.random.normal(ks[2], (n_head, d_head), jnp.float32),
        wr=lin(ks[3], NHDH, d_model),
        r_bias=jax.random.normal(ks[4], (n_head, d_head), jnp.float32),
        lnv_g=ones, lnv_b=zeros,                          # Values.norm
        wv=lin(ks[5], NHDH, d_model),
        wo=lin(ks[6], d_model, NHDH),
        g1_W=lin(ks[7], 3 * d_model, d_model),            # attn_gate
        g1_U=lin(ks[8], 2 * d_model, d_model),
        g1_Ug=lin(ks[9], d_model, d_model),
        g1_b=jnp.full((1, d_model), 2.0, jnp.float32),
        lnf_g=ones, lnf_b=zeros,                          # ff LayerNorm
        wff=lin(ks[10], d_model, d_model),
        bff=jax.random.uniform(ks[11], (1, d_model), jnp.float32,
                               -1.0 / np.sqrt(d_model), 1.0 / np.sqrt(d_model)),
        g2_W=lin(ks[12], 3 * d_model, d_model),           # ff_gate
        g2_U=lin(ks[13], 2 * d_model, d_model),
        g2_Ug=lin(ks[14], d_model, d_model),
        g2_b=jnp.full((1, d_model), 2.0, jnp.float32),
    )


if __name__ == "__main__":
    T, B, D = 8, 2, 32
    n_head, mem_len, n_layers = 1, 8, 2
    d_head = D // n_head

    key = jax.random.PRNGKey(0)
    kh, kp = jax.random.split(key, 2)
    h = jax.random.normal(kh, (T, B, D), jnp.float32)
    reset = jnp.zeros((T, B), dtype=bool).at[3, 0].set(True).at[5, 1].set(True)

    layer_keys = jax.random.split(kp, n_layers)
    layers = [init_layer_params(k, D, n_head, d_head) for k in layer_keys]

    out = transformer_forward(h, reset, layers, mem_len=mem_len)
    out = jax.block_until_ready(out)
    assert out.shape == (T, B, D) and out.dtype == jnp.float32
    assert bool(jnp.all(jnp.isfinite(out)))
    print("KERNEL_OK")
</pallas_src>

<mosaic_0001>
module attributes {stable_mosaic.version = 11 : i64} {
  func.func @_gated_attention_kernel(%arg0: i32, %arg1: memref<1x8x32xf32, #tpu.memory_space<vmem>>, %arg2: memref<1x8x1xi32, #tpu.memory_space<vmem>>, %arg3: memref<1x1x8xi32, #tpu.memory_space<vmem>>, %arg4: memref<8x32xf32, #tpu.memory_space<vmem>>, %arg5: memref<8x32xf32, #tpu.memory_space<vmem>>, %arg6: memref<32x8xbf16, #tpu.memory_space<vmem>>, %arg7: memref<32x8xbf16, #tpu.memory_space<vmem>>, %arg8: memref<1x32xf32, #tpu.memory_space<vmem>>, %arg9: memref<1x32xf32, #tpu.memory_space<vmem>>, %arg10: memref<32x64xbf16, #tpu.memory_space<vmem>>, %arg11: memref<1x32xf32, #tpu.memory_space<vmem>>, %arg12: memref<1x32xf32, #tpu.memory_space<vmem>>, %arg13: memref<32x32xbf16, #tpu.memory_space<vmem>>, %arg14: memref<1x32xf32, #tpu.memory_space<vmem>>, %arg15: memref<1x32xf32, #tpu.memory_space<vmem>>, %arg16: memref<32x32xbf16, #tpu.memory_space<vmem>>, %arg17: memref<32x32xbf16, #tpu.memory_space<vmem>>, %arg18: memref<32x160xbf16, #tpu.memory_space<vmem>>, %arg19: memref<32x32xbf16, #tpu.memory_space<vmem>>, %arg20: memref<1x32xf32, #tpu.memory_space<vmem>>, %arg21: memref<1x32xf32, #tpu.memory_space<vmem>>, %arg22: memref<1x32xf32, #tpu.memory_space<vmem>>, %arg23: memref<32x32xbf16, #tpu.memory_space<vmem>>, %arg24: memref<1x32xf32, #tpu.memory_space<vmem>>, %arg25: memref<32x160xbf16, #tpu.memory_space<vmem>>, %arg26: memref<32x32xbf16, #tpu.memory_space<vmem>>, %arg27: memref<1x32xf32, #tpu.memory_space<vmem>>, %arg28: memref<1x8x32xf32, #tpu.memory_space<vmem>>, %arg29: memref<8x32xf32, #tpu.memory_space<vmem>>) attributes {dimension_semantics = [#tpu.dimension_semantics<parallel>], iteration_bounds = array<i64: 2>, scalar_prefetch = 0 : i64, scratch_operands = 1 : i64, tpu.core_type = #tpu.core_type<tc>, window_params = [{transform_indices = @transform_0, window_bounds = array<i64: 1, 8, 32>}, {transform_indices = @transform_1, window_bounds = array<i64: 1, 8, 1>}, {transform_indices = @transform_2, window_bounds = array<i64: 1, 1, 8>}, {pipeline_mode = #tpu.pipeline_mode<synchronous>, transform_indices = @transform_3, window_bounds = array<i64: 8, 32>}, {pipeline_mode = #tpu.pipeline_mode<synchronous>, transform_indices = @transform_4, window_bounds = array<i64: 8, 32>}, {pipeline_mode = #tpu.pipeline_mode<synchronous>, transform_indices = @transform_5, window_bounds = array<i64: 32, 8>}, {pipeline_mode = #tpu.pipeline_mode<synchronous>, transform_indices = @transform_6, window_bounds = array<i64: 32, 8>}, {pipeline_mode = #tpu.pipeline_mode<synchronous>, transform_indices = @transform_7, window_bounds = array<i64: 1, 32>}, {pipeline_mode = #tpu.pipeline_mode<synchronous>, transform_indices = @transform_8, window_bounds = array<i64: 1, 32>}, {pipeline_mode = #tpu.pipeline_mode<synchronous>, transform_indices = @transform_9, window_bounds = array<i64: 32, 64>}, {pipeline_mode = #tpu.pipeline_mode<synchronous>, transform_indices = @transform_10, window_bounds = array<i64: 1, 32>}, {pipeline_mode = #tpu.pipeline_mode<synchronous>, transform_indices = @transform_11, window_bounds = array<i64: 1, 32>}, {pipeline_mode = #tpu.pipeline_mode<synchronous>, transform_indices = @transform_12, window_bounds = array<i64: 32, 32>}, {pipeline_mode = #tpu.pipeline_mode<synchronous>, transform_indices = @transform_13, window_bounds = array<i64: 1, 32>}, {pipeline_mode = #tpu.pipeline_mode<synchronous>, transform_indices = @transform_14, window_bounds = array<i64: 1, 32>}, {pipeline_mode = #tpu.pipeline_mode<synchronous>, transform_indices = @transform_15, window_bounds = array<i64: 32, 32>}, {pipeline_mode = #tpu.pipeline_mode<synchronous>, transform_indices = @transform_16, window_bounds = array<i64: 32, 32>}, {pipeline_mode = #tpu.pipeline_mode<synchronous>, transform_indices = @transform_17, window_bounds = array<i64: 32, 160>}, {pipeline_mode = #tpu.pipeline_mode<synchronous>, transform_indices = @transform_18, window_bounds = array<i64: 32, 32>}, {pipeline_mode = #tpu.pipeline_mode<synchronous>, transform_indices = @transform_19, window_bounds = array<i64: 1, 32>}, {pipeline_mode = #tpu.pipeline_mode<synchronous>, transform_indices = @transform_20, window_bounds = array<i64: 1, 32>}, {pipeline_mode = #tpu.pipeline_mode<synchronous>, transform_indices = @transform_21, window_bounds = array<i64: 1, 32>}, {pipeline_mode = #tpu.pipeline_mode<synchronous>, transform_indices = @transform_22, window_bounds = array<i64: 32, 32>}, {pipeline_mode = #tpu.pipeline_mode<synchronous>, transform_indices = @transform_23, window_bounds = array<i64: 1, 32>}, {pipeline_mode = #tpu.pipeline_mode<synchronous>, transform_indices = @transform_24, window_bounds = array<i64: 32, 160>}, {pipeline_mode = #tpu.pipeline_mode<synchronous>, transform_indices = @transform_25, window_bounds = array<i64: 32, 32>}, {pipeline_mode = #tpu.pipeline_mode<synchronous>, transform_indices = @transform_26, window_bounds = array<i64: 1, 32>}, {transform_indices = @transform_27, window_bounds = array<i64: 1, 8, 32>}]} {
    %c0 = arith.constant 0 : index
    %c0_0 = arith.constant 0 : index
    %c0_1 = arith.constant 0 : index
    %0 = vector.load %arg1[%c0, %c0_0, %c0_1] : memref<1x8x32xf32, #tpu.memory_space<vmem>>, vector<1x8x32xf32>
    %1 = vector.shape_cast %0 : vector<1x8x32xf32> to vector<8x32xf32>
    %c0_2 = arith.constant 0 : index
    %c0_3 = arith.constant 0 : index
    %c0_4 = arith.constant 0 : index
    %2 = vector.load %arg2[%c0_2, %c0_3, %c0_4] : memref<1x8x1xi32, #tpu.memory_space<vmem>>, vector<1x8x1xi32>
    %3 = vector.shape_cast %2 : vector<1x8x1xi32> to vector<8x1xi32>
    %c0_5 = arith.constant 0 : index
    %c0_6 = arith.constant 0 : index
    %c0_7 = arith.constant 0 : index
    %4 = vector.load %arg3[%c0_5, %c0_6, %c0_7] : memref<1x1x8xi32, #tpu.memory_space<vmem>>, vector<1x1x8xi32>
    %5 = vector.shape_cast %4 : vector<1x1x8xi32> to vector<1x8xi32>
    %6 = tpu.iota {dimensions = array<i32: 0>} : vector<8x8xi32>
    %7 = tpu.iota {dimensions = array<i32: 1>} : vector<8x8xi32>
    %c0_i32 = arith.constant 0 : i32
    %8 = vector.broadcast %c0_i32 : i32 to vector<8x8xi32>
    %9 = arith.addi %6, %8 : vector<8x8xi32>
    %10 = arith.cmpi sge, %7, %9 : vector<8x8xi32>
    %c8_i32 = arith.constant 8 : i32
    %11 = vector.broadcast %c8_i32 : i32 to vector<8x8xi32>
    %12 = arith.subi %6, %11 : vector<8x8xi32>
    %13 = arith.cmpi sle, %7, %12 : vector<8x8xi32>
    %14 = vector.broadcast %3 : vector<8x1xi32> to vector<8x8xi32>
    %15 = vector.broadcast %5 : vector<1x8xi32> to vector<8x8xi32>
    %16 = arith.subi %14, %15 : vector<8x8xi32>
    %c0_i32_8 = arith.constant 0 : i32
    %17 = vector.broadcast %c0_i32_8 : i32 to vector<8x8xi32>
    %18 = arith.cmpi sgt, %16, %17 : vector<8x8xi32>
    %19 = arith.cmpi slt, %7, %6 : vector<8x8xi32>
    %20 = arith.andi %18, %19 : vector<8x8xi1>
    %21 = arith.ori %10, %13 : vector<8x8xi1>
    %22 = arith.ori %21, %20 : vector<8x8xi1>
    %cst = arith.constant 0.000000e+00 : f32
    %cst_9 = arith.constant 1.000000e+00 : f32
    %23 = vector.broadcast %cst : f32 to vector<8x8xf32>
    %24 = vector.broadcast %cst_9 : f32 to vector<8x8xf32>
    %25 = arith.select %22, %23, %24 : vector<8x8xi1>, vector<8x8xf32>
    %cst_10 = arith.constant dense<0xFF800000> : vector<8xf32>
    %26 = vector.multi_reduction <maximumf>, %25, %cst_10 [1] : vector<8x8xf32> to vector<8xf32>
    %27 = vector.shape_cast %26 : vector<8xf32> to vector<8x1xf32>
    %c0_11 = arith.constant 0 : index
    %c0_12 = arith.constant 0 : index
    %28 = vector.load %arg8[%c0_11, %c0_12] : memref<1x32xf32, #tpu.memory_space<vmem>>, vector<1x32xf32>
    %c0_13 = arith.constant 0 : index
    %c0_14 = arith.constant 0 : index
    %29 = vector.load %arg9[%c0_13, %c0_14] : memref<1x32xf32, #tpu.memory_space<vmem>>, vector<1x32xf32>
    %cst_15 = arith.constant dense<0.000000e+00> : vector<8xf32>
    %30 = vector.multi_reduction <add>, %1, %cst_15 [1] : vector<8x32xf32> to vector<8xf32>
    %31 = vector.shape_cast %30 : vector<8xf32> to vector<8x1xf32>
    %cst_16 = arith.constant 3.200000e+01 : f32
    %32 = vector.broadcast %cst_16 : f32 to vector<8x1xf32>
    %33 = arith.divf %31, %32 : vector<8x1xf32>
    %34 = vector.broadcast %33 : vector<8x1xf32> to vector<8x32xf32>
    %35 = arith.subf %1, %34 : vector<8x32xf32>
    %36 = arith.mulf %35, %35 : vector<8x32xf32>
    %cst_17 = arith.constant dense<0.000000e+00> : vector<8xf32>
    %37 = vector.multi_reduction <add>, %36, %cst_17 [1] : vector<8x32xf32> to vector<8xf32>
    %38 = vector.shape_cast %37 : vector<8xf32> to vector<8x1xf32>
    %cst_18 = arith.constant 3.200000e+01 : f32
    %39 = vector.broadcast %cst_18 : f32 to vector<8x1xf32>
    %40 = arith.divf %38, %39 : vector<8x1xf32>
    %41 = vector.broadcast %33 : vector<8x1xf32> to vector<8x32xf32>
    %42 = arith.subf %1, %41 : vector<8x32xf32>
    %cst_19 = arith.constant 9.99999974E-6 : f32
    %43 = vector.broadcast %cst_19 : f32 to vector<8x1xf32>
    %44 = arith.addf %40, %43 : vector<8x1xf32>
    %45 = math.rsqrt %44 : vector<8x1xf32>
    %46 = vector.broadcast %45 : vector<8x1xf32> to vector<8x32xf32>
    %47 = arith.mulf %42, %46 : vector<8x32xf32>
    %48 = vector.broadcast %28 : vector<1x32xf32> to vector<8x32xf32>
    %49 = arith.mulf %47, %48 : vector<8x32xf32>
    %50 = vector.broadcast %29 : vector<1x32xf32> to vector<8x32xf32>
    %51 = arith.addf %49, %50 : vector<8x32xf32>
    %52 = arith.truncf %51 : vector<8x32xf32> to vector<8x32xbf16>
    %c0_20 = arith.constant 0 : index
    %c0_21 = arith.constant 0 : index
    %53 = vector.load %arg14[%c0_20, %c0_21] : memref<1x32xf32, #tpu.memory_space<vmem>>, vector<1x32xf32>
    %c0_22 = arith.constant 0 : index
    %c0_23 = arith.constant 0 : index
    %54 = vector.load %arg15[%c0_22, %c0_23] : memref<1x32xf32, #tpu.memory_space<vmem>>, vector<1x32xf32>
    %cst_24 = arith.constant dense<0.000000e+00> : vector<8xf32>
    %55 = vector.multi_reduction <add>, %1, %cst_24 [1] : vector<8x32xf32> to vector<8xf32>
    %56 = vector.shape_cast %55 : vector<8xf32> to vector<8x1xf32>
    %cst_25 = arith.constant 3.200000e+01 : f32
    %57 = vector.broadcast %cst_25 : f32 to vector<8x1xf32>
    %58 = arith.divf %56, %57 : vector<8x1xf32>
    %59 = vector.broadcast %58 : vector<8x1xf32> to vector<8x32xf32>
    %60 = arith.subf %1, %59 : vector<8x32xf32>
    %61 = arith.mulf %60, %60 : vector<8x32xf32>
    %cst_26 = arith.constant dense<0.000000e+00> : vector<8xf32>
    %62 = vector.multi_reduction <add>, %61, %cst_26 [1] : vector<8x32xf32> to vector<8xf32>
    %63 = vector.shape_cast %62 : vector<8xf32> to vector<8x1xf32>
    %cst_27 = arith.constant 3.200000e+01 : f32
    %64 = vector.broadcast %cst_27 : f32 to vector<8x1xf32>
    %65 = arith.divf %63, %64 : vector<8x1xf32>
    %66 = vector.broadcast %58 : vector<8x1xf32> to vector<8x32xf32>
    %67 = arith.subf %1, %66 : vector<8x32xf32>
    %cst_28 = arith.constant 9.99999974E-6 : f32
    %68 = vector.broadcast %cst_28 : f32 to vector<8x1xf32>
    %69 = arith.addf %65, %68 : vector<8x1xf32>
    %70 = math.rsqrt %69 : vector<8x1xf32>
    %71 = vector.broadcast %70 : vector<8x1xf32> to vector<8x32xf32>
    %72 = arith.mulf %67, %71 : vector<8x32xf32>
    %73 = vector.broadcast %53 : vector<1x32xf32> to vector<8x32xf32>
    %74 = arith.mulf %72, %73 : vector<8x32xf32>
    %75 = vector.broadcast %54 : vector<1x32xf32> to vector<8x32xf32>
    %76 = arith.addf %74, %75 : vector<8x32xf32>
    %77 = arith.truncf %76 : vector<8x32xf32> to vector<8x32xbf16>
    %c0_29 = arith.constant 0 : index
    %c0_30 = arith.constant 0 : index
    %78 = vector.load %arg10[%c0_29, %c0_30] : memref<32x64xbf16, #tpu.memory_space<vmem>>, vector<32x64xbf16>
    %cst_31 = arith.constant dense<0.000000e+00> : vector<8x64xf32>
    %79 = tpu.matmul %52, %78, %cst_31 {dimension_numbers = #tpu.dot_dimension_numbers<[1], [0], [0], [1], [0, 0, 1, 1], [], []>} : vector<8x32xbf16>, vector<32x64xbf16>, vector<8x64xf32> -> vector<8x64xf32>
    %80 = vector.extract_strided_slice %79 {offsets = [0, 0], sizes = [8, 32], strides = [1, 1]} : vector<8x64xf32> to vector<8x32xf32>
    %81 = vector.extract_strided_slice %79 {offsets = [0, 32], sizes = [8, 32], strides = [1, 1]} : vector<8x64xf32> to vector<8x32xf32>
    %c0_32 = arith.constant 0 : index
    %c0_33 = arith.constant 0 : index
    %82 = vector.load %arg16[%c0_32, %c0_33] : memref<32x32xbf16, #tpu.memory_space<vmem>>, vector<32x32xbf16>
    %cst_34 = arith.constant dense<0.000000e+00> : vector<8x32xf32>
    %83 = tpu.matmul %77, %82, %cst_34 {dimension_numbers = #tpu.dot_dimension_numbers<[1], [0], [0], [1], [0, 0, 1, 1], [], []>} : vector<8x32xbf16>, vector<32x32xbf16>, vector<8x32xf32> -> vector<8x32xf32>
    %c0_35 = arith.constant 0 : index
    %c0_36 = arith.constant 0 : index
    %84 = vector.load %arg11[%c0_35, %c0_36] : memref<1x32xf32, #tpu.memory_space<vmem>>, vector<1x32xf32>
    %85 = vector.broadcast %84 : vector<1x32xf32> to vector<8x32xf32>
    %86 = arith.addf %80, %85 : vector<8x32xf32>
    %87 = arith.truncf %86 : vector<8x32xf32> to vector<8x32xbf16>
    %c0_37 = arith.constant 0 : index
    %c0_38 = arith.constant 0 : index
    %88 = vector.load %arg12[%c0_37, %c0_38] : memref<1x32xf32, #tpu.memory_space<vmem>>, vector<1x32xf32>
    %89 = vector.broadcast %88 : vector<1x32xf32> to vector<8x32xf32>
    %90 = arith.addf %80, %89 : vector<8x32xf32>
    %91 = arith.truncf %90 : vector<8x32xf32> to vector<8x32xbf16>
    %92 = arith.truncf %81 : vector<8x32xf32> to vector<8x32xbf16>
    %93 = arith.truncf %83 : vector<8x32xf32> to vector<8x32xbf16>
    %c0_39 = arith.constant 0 : index
    %c0_40 = arith.constant 0 : index
    %94 = vector.load %arg13[%c0_39, %c0_40] : memref<32x32xbf16, #tpu.memory_space<vmem>>, vector<32x32xbf16>
    %c0_41 = arith.constant 0 : index
    %c0_42 = arith.constant 0 : index
    %95 = vector.load %arg4[%c0_41, %c0_42] : memref<8x32xf32, #tpu.memory_space<vmem>>, vector<8x32xf32>
    %c0_43 = arith.constant 0 : index
    %c0_44 = arith.constant 0 : index
    %96 = vector.load %arg5[%c0_43, %c0_44] : memref<8x32xf32, #tpu.memory_space<vmem>>, vector<8x32xf32>
    %c0_45 = arith.constant 0 : index
    %c0_46 = arith.constant 0 : index
    %97 = vector.load %arg6[%c0_45, %c0_46] : memref<32x8xbf16, #tpu.memory_space<vmem>>, vector<32x8xbf16>
    %c0_47 = arith.constant 0 : index
    %c0_48 = arith.constant 0 : index
    %98 = vector.load %arg7[%c0_47, %c0_48] : memref<32x8xbf16, #tpu.memory_space<vmem>>, vector<32x8xbf16>
    %cst_49 = arith.constant dense<0.000000e+00> : vector<8x8xf32>
    %99 = tpu.matmul %87, %92, %cst_49 {dimension_numbers = #tpu.dot_dimension_numbers<[1], [1], [0], [0], [0, 0, 1, 0], [], []>} : vector<8x32xbf16>, vector<8x32xbf16>, vector<8x8xf32> -> vector<8x8xf32>
    %cst_50 = arith.constant dense<0.000000e+00> : vector<8x32xf32>
    %100 = tpu.matmul %91, %94, %cst_50 {dimension_numbers = #tpu.dot_dimension_numbers<[1], [0], [0], [1], [0, 0, 1, 1], [], []>} : vector<8x32xbf16>, vector<32x32xbf16>, vector<8x32xf32> -> vector<8x32xf32>
    %101 = arith.mulf %100, %95 : vector<8x32xf32>
    %102 = arith.truncf %101 : vector<8x32xf32> to vector<8x32xbf16>
    %cst_51 = arith.constant dense<0.000000e+00> : vector<8x8xf32>
    %103 = tpu.matmul %102, %97, %cst_51 {dimension_numbers = #tpu.dot_dimension_numbers<[1], [0], [0], [1], [0, 0, 1, 1], [], []>} : vector<8x32xbf16>, vector<32x8xbf16>, vector<8x8xf32> -> vector<8x8xf32>
    %104 = arith.mulf %100, %96 : vector<8x32xf32>
    %105 = arith.truncf %104 : vector<8x32xf32> to vector<8x32xbf16>
    %cst_52 = arith.constant dense<0.000000e+00> : vector<8x8xf32>
    %106 = tpu.matmul %105, %98, %cst_52 {dimension_numbers = #tpu.dot_dimension_numbers<[1], [0], [0], [1], [0, 0, 1, 1], [], []>} : vector<8x32xbf16>, vector<32x8xbf16>, vector<8x8xf32> -> vector<8x8xf32>
    %107 = arith.addf %103, %106 : vector<8x8xf32>
    %108 = arith.addf %99, %107 : vector<8x8xf32>
    %cst_53 = arith.constant 0.176776692 : f32
    %109 = vector.broadcast %cst_53 : f32 to vector<8x8xf32>
    %110 = arith.mulf %108, %109 : vector<8x8xf32>
    %cst_54 = arith.constant -6.500000e+04 : f32
    %111 = vector.broadcast %cst_54 : f32 to vector<8x8xf32>
    %112 = arith.select %22, %111, %110 : vector<8x8xi1>, vector<8x8xf32>
    %cst_55 = arith.constant -6.500000e+04 : f32
    %cst_56 = arith.constant 6.500000e+04 : f32
    %113 = vector.broadcast %cst_55 : f32 to vector<8x8xf32>
    %114 = arith.maximumf %113, %112 : vector<8x8xf32>
    %115 = vector.broadcast %cst_56 : f32 to vector<8x8xf32>
    %116 = arith.minimumf %115, %114 : vector<8x8xf32>
    %cst_57 = arith.constant dense<0xFF800000> : vector<8xf32>
    %117 = vector.multi_reduction <maximumf>, %116, %cst_57 [1] : vector<8x8xf32> to vector<8xf32>
    %118 = vector.shape_cast %117 : vector<8xf32> to vector<8x1xf32>
    %119 = vector.broadcast %118 : vector<8x1xf32> to vector<8x8xf32>
    %120 = arith.subf %116, %119 : vector<8x8xf32>
    %121 = math.exp %120 : vector<8x8xf32>
    %cst_58 = arith.constant dense<0.000000e+00> : vector<8xf32>
    %122 = vector.multi_reduction <add>, %121, %cst_58 [1] : vector<8x8xf32> to vector<8xf32>
    %123 = vector.shape_cast %122 : vector<8xf32> to vector<8x1xf32>
    %124 = tpu.reciprocal %123 {approx = true} : vector<8x1xf32> -> vector<8x1xf32>
    %125 = vector.broadcast %124 : vector<8x1xf32> to vector<8x8xf32>
    %126 = arith.mulf %121, %125 : vector<8x8xf32>
    %127 = vector.broadcast %27 : vector<8x1xf32> to vector<8x8xf32>
    %128 = arith.mulf %126, %127 : vector<8x8xf32>
    %129 = arith.truncf %128 : vector<8x8xf32> to vector<8x8xbf16>
    %cst_59 = arith.constant dense<0.000000e+00> : vector<8x32xf32>
    %130 = tpu.matmul %129, %93, %cst_59 {dimension_numbers = #tpu.dot_dimension_numbers<[1], [0], [0], [1], [0, 0, 1, 1], [], []>} : vector<8x8xbf16>, vector<8x32xbf16>, vector<8x32xf32> -> vector<8x32xf32>
    %c0_60 = arith.constant 0 : index
    %c0_61 = arith.constant 0 : index
    %131 = vector.load %arg29[%c0_60, %c0_61] : memref<8x32xf32, #tpu.memory_space<vmem>>, vector<8x32xf32>
    tpu.vector_store %arg29[%c0_60, %c0_61], %130 {strides = array<i32>} : memref<8x32xf32, #tpu.memory_space<vmem>>, vector<8x32xf32>,
    %c0_62 = arith.constant 0 : index
    %c0_63 = arith.constant 0 : index
    %132 = vector.load %arg29[%c0_62, %c0_63] : memref<8x32xf32, #tpu.memory_space<vmem>>, vector<8x32xf32>
    %133 = arith.truncf %132 : vector<8x32xf32> to vector<8x32xbf16>
    %c0_64 = arith.constant 0 : index
    %c0_65 = arith.constant 0 : index
    %134 = vector.load %arg17[%c0_64, %c0_65] : memref<32x32xbf16, #tpu.memory_space<vmem>>, vector<32x32xbf16>
    %cst_66 = arith.constant dense<0.000000e+00> : vector<8x32xf32>
    %135 = tpu.matmul %133, %134, %cst_66 {dimension_numbers = #tpu.dot_dimension_numbers<[1], [0], [0], [1], [0, 0, 1, 1], [], []>} : vector<8x32xbf16>, vector<32x32xbf16>, vector<8x32xf32> -> vector<8x32xf32>
    %cst_67 = arith.constant 0.000000e+00 : f32
    %136 = vector.broadcast %cst_67 : f32 to vector<8x32xf32>
    %137 = arith.maximumf %135, %136 : vector<8x32xf32>
    %c0_68 = arith.constant 0 : index
    %c0_69 = arith.constant 0 : index
    %138 = vector.load %arg18[%c0_68, %c0_69] : memref<32x160xbf16, #tpu.memory_space<vmem>>, vector<32x160xbf16>
    %c0_70 = arith.constant 0 : index
    %c0_71 = arith.constant 0 : index
    %139 = vector.load %arg19[%c0_70, %c0_71] : memref<32x32xbf16, #tpu.memory_space<vmem>>, vector<32x32xbf16>
    %c0_72 = arith.constant 0 : index
    %c0_73 = arith.constant 0 : index
    %140 = vector.load %arg20[%c0_72, %c0_73] : memref<1x32xf32, #tpu.memory_space<vmem>>, vector<1x32xf32>
    %141 = arith.truncf %137 : vector<8x32xf32> to vector<8x32xbf16>
    %cst_74 = arith.constant dense<0.000000e+00> : vector<8x160xf32>
    %142 = tpu.matmul %141, %138, %cst_74 {dimension_numbers = #tpu.dot_dimension_numbers<[1], [0], [0], [1], [0, 0, 1, 1], [], []>} : vector<8x32xbf16>, vector<32x160xbf16>, vector<8x160xf32> -> vector<8x160xf32>
    %143 = vector.extract_strided_slice %142 {offsets = [0, 0], sizes = [8, 32], strides = [1, 1]} : vector<8x160xf32> to vector<8x32xf32>
    %144 = vector.extract_strided_slice %142 {offsets = [0, 32], sizes = [8, 32], strides = [1, 1]} : vector<8x160xf32> to vector<8x32xf32>
    %145 = vector.extract_strided_slice %142 {offsets = [0, 64], sizes = [8, 32], strides = [1, 1]} : vector<8x160xf32> to vector<8x32xf32>
    %146 = vector.extract_strided_slice %142 {offsets = [0, 96], sizes = [8, 32], strides = [1, 1]} : vector<8x160xf32> to vector<8x32xf32>
    %147 = vector.extract_strided_slice %142 {offsets = [0, 128], sizes = [8, 32], strides = [1, 1]} : vector<8x160xf32> to vector<8x32xf32>
    %148 = arith.addf %143, %146 : vector<8x32xf32>
    %149 = arith.negf %148 : vector<8x32xf32>
    %150 = math.exp %149 : vector<8x32xf32>
    %cst_75 = arith.constant 1.000000e+00 : f32
    %151 = vector.broadcast %cst_75 : f32 to vector<8x32xf32>
    %152 = arith.addf %151, %150 : vector<8x32xf32>
    %153 = arith.divf %151, %152 : vector<8x32xf32>
    %154 = arith.addf %144, %147 : vector<8x32xf32>
    %155 = vector.broadcast %140 : vector<1x32xf32> to vector<8x32xf32>
    %156 = arith.subf %154, %155 : vector<8x32xf32>
    %157 = arith.negf %156 : vector<8x32xf32>
    %158 = math.exp %157 : vector<8x32xf32>
    %cst_76 = arith.constant 1.000000e+00 : f32
    %159 = vector.broadcast %cst_76 : f32 to vector<8x32xf32>
    %160 = arith.addf %159, %158 : vector<8x32xf32>
    %161 = arith.divf %159, %160 : vector<8x32xf32>
    %162 = arith.mulf %153, %1 : vector<8x32xf32>
    %163 = arith.truncf %162 : vector<8x32xf32> to vector<8x32xbf16>
    %cst_77 = arith.constant dense<0.000000e+00> : vector<8x32xf32>
    %164 = tpu.matmul %163, %139, %cst_77 {dimension_numbers = #tpu.dot_dimension_numbers<[1], [0], [0], [1], [0, 0, 1, 1], [], []>} : vector<8x32xbf16>, vector<32x32xbf16>, vector<8x32xf32> -> vector<8x32xf32>
    %165 = arith.addf %145, %164 : vector<8x32xf32>
    %166 = math.tanh %165 : vector<8x32xf32>
    %cst_78 = arith.constant 1.000000e+00 : f32
    %167 = vector.broadcast %cst_78 : f32 to vector<8x32xf32>
    %168 = arith.subf %167, %161 : vector<8x32xf32>
    %169 = arith.mulf %168, %1 : vector<8x32xf32>
    %170 = arith.mulf %161, %166 : vector<8x32xf32>
    %171 = arith.addf %169, %170 : vector<8x32xf32>
    %c0_79 = arith.constant 0 : index
    %c0_80 = arith.constant 0 : index
    %172 = vector.load %arg21[%c0_79, %c0_80] : memref<1x32xf32, #tpu.memory_space<vmem>>, vector<1x32xf32>
    %c0_81 = arith.constant 0 : index
    %c0_82 = arith.constant 0 : index
    %173 = vector.load %arg22[%c0_81, %c0_82] : memref<1x32xf32, #tpu.memory_space<vmem>>, vector<1x32xf32>
    %cst_83 = arith.constant dense<0.000000e+00> : vector<8xf32>
    %174 = vector.multi_reduction <add>, %171, %cst_83 [1] : vector<8x32xf32> to vector<8xf32>
    %175 = vector.shape_cast %174 : vector<8xf32> to vector<8x1xf32>
    %cst_84 = arith.constant 3.200000e+01 : f32
    %176 = vector.broadcast %cst_84 : f32 to vector<8x1xf32>
    %177 = arith.divf %175, %176 : vector<8x1xf32>
    %178 = vector.broadcast %177 : vector<8x1xf32> to vector<8x32xf32>
    %179 = arith.subf %171, %178 : vector<8x32xf32>
    %180 = arith.mulf %179, %179 : vector<8x32xf32>
    %cst_85 = arith.constant dense<0.000000e+00> : vector<8xf32>
    %181 = vector.multi_reduction <add>, %180, %cst_85 [1] : vector<8x32xf32> to vector<8xf32>
    %182 = vector.shape_cast %181 : vector<8xf32> to vector<8x1xf32>
    %cst_86 = arith.constant 3.200000e+01 : f32
    %183 = vector.broadcast %cst_86 : f32 to vector<8x1xf32>
    %184 = arith.divf %182, %183 : vector<8x1xf32>
    %185 = vector.broadcast %177 : vector<8x1xf32> to vector<8x32xf32>
    %186 = arith.subf %171, %185 : vector<8x32xf32>
    %cst_87 = arith.constant 9.99999974E-6 : f32
    %187 = vector.broadcast %cst_87 : f32 to vector<8x1xf32>
    %188 = arith.addf %184, %187 : vector<8x1xf32>
    %189 = math.rsqrt %188 : vector<8x1xf32>
    %190 = vector.broadcast %189 : vector<8x1xf32> to vector<8x32xf32>
    %191 = arith.mulf %186, %190 : vector<8x32xf32>
    %192 = vector.broadcast %172 : vector<1x32xf32> to vector<8x32xf32>
    %193 = arith.mulf %191, %192 : vector<8x32xf32>
    %194 = vector.broadcast %173 : vector<1x32xf32> to vector<8x32xf32>
    %195 = arith.addf %193, %194 : vector<8x32xf32>
    %196 = arith.truncf %195 : vector<8x32xf32> to vector<8x32xbf16>
    %c0_88 = arith.constant 0 : index
    %c0_89 = arith.constant 0 : index
    %197 = vector.load %arg23[%c0_88, %c0_89] : memref<32x32xbf16, #tpu.memory_space<vmem>>, vector<32x32xbf16>
    %cst_90 = arith.constant dense<0.000000e+00> : vector<8x32xf32>
    %198 = tpu.matmul %196, %197, %cst_90 {dimension_numbers = #tpu.dot_dimension_numbers<[1], [0], [0], [1], [0, 0, 1, 1], [], []>} : vector<8x32xbf16>, vector<32x32xbf16>, vector<8x32xf32> -> vector<8x32xf32>
    %c0_91 = arith.constant 0 : index
    %c0_92 = arith.constant 0 : index
    %199 = vector.load %arg24[%c0_91, %c0_92] : memref<1x32xf32, #tpu.memory_space<vmem>>, vector<1x32xf32>
    %200 = vector.broadcast %199 : vector<1x32xf32> to vector<8x32xf32>
    %201 = arith.addf %198, %200 : vector<8x32xf32>
    %cst_93 = arith.constant 0.000000e+00 : f32
    %202 = vector.broadcast %cst_93 : f32 to vector<8x32xf32>
    %203 = arith.maximumf %201, %202 : vector<8x32xf32>
    %c0_94 = arith.constant 0 : index
    %c0_95 = arith.constant 0 : index
    %204 = vector.load %arg25[%c0_94, %c0_95] : memref<32x160xbf16, #tpu.memory_space<vmem>>, vector<32x160xbf16>
    %c0_96 = arith.constant 0 : index
    %c0_97 = arith.constant 0 : index
    %205 = vector.load %arg26[%c0_96, %c0_97] : memref<32x32xbf16, #tpu.memory_space<vmem>>, vector<32x32xbf16>
    %c0_98 = arith.constant 0 : index
    %c0_99 = arith.constant 0 : index
    %206 = vector.load %arg27[%c0_98, %c0_99] : memref<1x32xf32, #tpu.memory_space<vmem>>, vector<1x32xf32>
    %207 = arith.truncf %203 : vector<8x32xf32> to vector<8x32xbf16>
    %cst_100 = arith.constant dense<0.000000e+00> : vector<8x160xf32>
    %208 = tpu.matmul %207, %204, %cst_100 {dimension_numbers = #tpu.dot_dimension_numbers<[1], [0], [0], [1], [0, 0, 1, 1], [], []>} : vector<8x32xbf16>, vector<32x160xbf16>, vector<8x160xf32> -> vector<8x160xf32>
    %209 = vector.extract_strided_slice %208 {offsets = [0, 0], sizes = [8, 32], strides = [1, 1]} : vector<8x160xf32> to vector<8x32xf32>
    %210 = vector.extract_strided_slice %208 {offsets = [0, 32], sizes = [8, 32], strides = [1, 1]} : vector<8x160xf32> to vector<8x32xf32>
    %211 = vector.extract_strided_slice %208 {offsets = [0, 64], sizes = [8, 32], strides = [1, 1]} : vector<8x160xf32> to vector<8x32xf32>
    %212 = vector.extract_strided_slice %208 {offsets = [0, 96], sizes = [8, 32], strides = [1, 1]} : vector<8x160xf32> to vector<8x32xf32>
    %213 = vector.extract_strided_slice %208 {offsets = [0, 128], sizes = [8, 32], strides = [1, 1]} : vector<8x160xf32> to vector<8x32xf32>
    %214 = arith.addf %209, %212 : vector<8x32xf32>
    %215 = arith.negf %214 : vector<8x32xf32>
    %216 = math.exp %215 : vector<8x32xf32>
    %cst_101 = arith.constant 1.000000e+00 : f32
    %217 = vector.broadcast %cst_101 : f32 to vector<8x32xf32>
    %218 = arith.addf %217, %216 : vector<8x32xf32>
    %219 = arith.divf %217, %218 : vector<8x32xf32>
    %220 = arith.addf %210, %213 : vector<8x32xf32>
    %221 = vector.broadcast %206 : vector<1x32xf32> to vector<8x32xf32>
    %222 = arith.subf %220, %221 : vector<8x32xf32>
    %223 = arith.negf %222 : vector<8x32xf32>
    %224 = math.exp %223 : vector<8x32xf32>
    %cst_102 = arith.constant 1.000000e+00 : f32
    %225 = vector.broadcast %cst_102 : f32 to vector<8x32xf32>
    %226 = arith.addf %225, %224 : vector<8x32xf32>
    %227 = arith.divf %225, %226 : vector<8x32xf32>
    %228 = arith.mulf %219, %171 : vector<8x32xf32>
    %229 = arith.truncf %228 : vector<8x32xf32> to vector<8x32xbf16>
    %cst_103 = arith.constant dense<0.000000e+00> : vector<8x32xf32>
    %230 = tpu.matmul %229, %205, %cst_103 {dimension_numbers = #tpu.dot_dimension_numbers<[1], [0], [0], [1], [0, 0, 1, 1], [], []>} : vector<8x32xbf16>, vector<32x32xbf16>, vector<8x32xf32> -> vector<8x32xf32>
    %231 = arith.addf %211, %230 : vector<8x32xf32>
    %232 = math.tanh %231 : vector<8x32xf32>
    %cst_104 = arith.constant 1.000000e+00 : f32
    %233 = vector.broadcast %cst_104 : f32 to vector<8x32xf32>
    %234 = arith.subf %233, %227 : vector<8x32xf32>
    %235 = arith.mulf %234, %171 : vector<8x32xf32>
    %236 = arith.mulf %227, %232 : vector<8x32xf32>
    %237 = arith.addf %235, %236 : vector<8x32xf32>
    %c0_105 = arith.constant 0 : index
    %c0_106 = arith.constant 0 : index
    %c0_107 = arith.constant 0 : index
    %238 = vector.load %arg28[%c0_105, %c0_106, %c0_107] : memref<1x8x32xf32, #tpu.memory_space<vmem>>, vector<1x8x32xf32>
    %239 = vector.shape_cast %238 : vector<1x8x32xf32> to vector<8x32xf32>
    %240 = vector.shape_cast %237 : vector<8x32xf32> to vector<1x8x32xf32>
    tpu.vector_store %arg28[%c0_105, %c0_106, %c0_107], %240 {strides = array<i32>} : memref<1x8x32xf32, #tpu.memory_space<vmem>>, vector<1x8x32xf32>,
    return
  }
  func.func @transform_0(%arg0: i32) -> (i32, i32, i32) {
    %c0_i32 = arith.constant 0 : i32
    %c0_i32_0 = arith.constant 0 : i32
    %c0_i32_1 = arith.constant 0 : i32
    return %arg0, %c0_i32, %c0_i32_0 : i32, i32, i32
  }
  func.func @transform_1(%arg0: i32) -> (i32, i32, i32) {
    %c0_i32 = arith.constant 0 : i32
    %c0_i32_0 = arith.constant 0 : i32
    %c0_i32_1 = arith.constant 0 : i32
    return %arg0, %c0_i32, %c0_i32_0 : i32, i32, i32
  }
  func.func @transform_2(%arg0: i32) -> (i32, i32, i32) {
    %c0_i32 = arith.constant 0 : i32
    %c0_i32_0 = arith.constant 0 : i32
    %c0_i32_1 = arith.constant 0 : i32
    return %arg0, %c0_i32, %c0_i32_0 : i32, i32, i32
  }
  func.func @transform_3(%arg0: i32) -> (i32, i32) {
    %c0_i32 = arith.constant 0 : i32
    %c0_i32_0 = arith.constant 0 : i32
    %c0_i32_1 = arith.constant 0 : i32
    return %c0_i32, %c0_i32_0 : i32, i32
  }
  func.func @transform_4(%arg0: i32) -> (i32, i32) {
    %c0_i32 = arith.constant 0 : i32
    %c0_i32_0 = arith.constant 0 : i32
    %c0_i32_1 = arith.constant 0 : i32
    return %c0_i32, %c0_i32_0 : i32, i32
  }
  func.func @transform_5(%arg0: i32) -> (i32, i32) {
    %c0_i32 = arith.constant 0 : i32
    %c0_i32_0 = arith.constant 0 : i32
    %c0_i32_1 = arith.constant 0 : i32
    return %c0_i32, %c0_i32_0 : i32, i32
  }
  func.func @transform_6(%arg0: i32) -> (i32, i32) {
    %c0_i32 = arith.constant 0 : i32
    %c0_i32_0 = arith.constant 0 : i32
    %c0_i32_1 = arith.constant 0 : i32
    return %c0_i32, %c0_i32_0 : i32, i32
  }
  func.func @transform_7(%arg0: i32) -> (i32, i32) {
    %c0_i32 = arith.constant 0 : i32
    %c0_i32_0 = arith.constant 0 : i32
    %c0_i32_1 = arith.constant 0 : i32
    return %c0_i32, %c0_i32_0 : i32, i32
  }
  func.func @transform_8(%arg0: i32) -> (i32, i32) {
    %c0_i32 = arith.constant 0 : i32
    %c0_i32_0 = arith.constant 0 : i32
    %c0_i32_1 = arith.constant 0 : i32
    return %c0_i32, %c0_i32_0 : i32, i32
  }
  func.func @transform_9(%arg0: i32) -> (i32, i32) {
    %c0_i32 = arith.constant 0 : i32
    %c0_i32_0 = arith.constant 0 : i32
    %c0_i32_1 = arith.constant 0 : i32
    return %c0_i32, %c0_i32_0 : i32, i32
  }
  func.func @transform_10(%arg0: i32) -> (i32, i32) {
    %c0_i32 = arith.constant 0 : i32
    %c0_i32_0 = arith.constant 0 : i32
    %c0_i32_1 = arith.constant 0 : i32
    return %c0_i32, %c0_i32_0 : i32, i32
  }
  func.func @transform_11(%arg0: i32) -> (i32, i32) {
    %c0_i32 = arith.constant 0 : i32
    %c0_i32_0 = arith.constant 0 : i32
    %c0_i32_1 = arith.constant 0 : i32
    return %c0_i32, %c0_i32_0 : i32, i32
  }
  func.func @transform_12(%arg0: i32) -> (i32, i32) {
    %c0_i32 = arith.constant 0 : i32
    %c0_i32_0 = arith.constant 0 : i32
    %c0_i32_1 = arith.constant 0 : i32
    return %c0_i32, %c0_i32_0 : i32, i32
  }
  func.func @transform_13(%arg0: i32) -> (i32, i32) {
    %c0_i32 = arith.constant 0 : i32
    %c0_i32_0 = arith.constant 0 : i32
    %c0_i32_1 = arith.constant 0 : i32
    return %c0_i32, %c0_i32_0 : i32, i32
  }
  func.func @transform_14(%arg0: i32) -> (i32, i32) {
    %c0_i32 = arith.constant 0 : i32
    %c0_i32_0 = arith.constant 0 : i32
    %c0_i32_1 = arith.constant 0 : i32
    return %c0_i32, %c0_i32_0 : i32, i32
  }
  func.func @transform_15(%arg0: i32) -> (i32, i32) {
    %c0_i32 = arith.constant 0 : i32
    %c0_i32_0 = arith.constant 0 : i32
    %c0_i32_1 = arith.constant 0 : i32
    return %c0_i32, %c0_i32_0 : i32, i32
  }
  func.func @transform_16(%arg0: i32) -> (i32, i32) {
    %c0_i32 = arith.constant 0 : i32
    %c0_i32_0 = arith.constant 0 : i32
    %c0_i32_1 = arith.constant 0 : i32
    return %c0_i32, %c0_i32_0 : i32, i32
  }
  func.func @transform_17(%arg0: i32) -> (i32, i32) {
    %c0_i32 = arith.constant 0 : i32
    %c0_i32_0 = arith.constant 0 : i32
    %c0_i32_1 = arith.constant 0 : i32
    return %c0_i32, %c0_i32_0 : i32, i32
  }
  func.func @transform_18(%arg0: i32) -> (i32, i32) {
    %c0_i32 = arith.constant 0 : i32
    %c0_i32_0 = arith.constant 0 : i32
    %c0_i32_1 = arith.constant 0 : i32
    return %c0_i32, %c0_i32_0 : i32, i32
  }
  func.func @transform_19(%arg0: i32) -> (i32, i32) {
    %c0_i32 = arith.constant 0 : i32
    %c0_i32_0 = arith.constant 0 : i32
    %c0_i32_1 = arith.constant 0 : i32
    return %c0_i32, %c0_i32_0 : i32, i32
  }
  func.func @transform_20(%arg0: i32) -> (i32, i32) {
    %c0_i32 = arith.constant 0 : i32
    %c0_i32_0 = arith.constant 0 : i32
    %c0_i32_1 = arith.constant 0 : i32
    return %c0_i32, %c0_i32_0 : i32, i32
  }
  func.func @transform_21(%arg0: i32) -> (i32, i32) {
    %c0_i32 = arith.constant 0 : i32
    %c0_i32_0 = arith.constant 0 : i32
    %c0_i32_1 = arith.constant 0 : i32
    return %c0_i32, %c0_i32_0 : i32, i32
  }
  func.func @transform_22(%arg0: i32) -> (i32, i32) {
    %c0_i32 = arith.constant 0 : i32
    %c0_i32_0 = arith.constant 0 : i32
    %c0_i32_1 = arith.constant 0 : i32
    return %c0_i32, %c0_i32_0 : i32, i32
  }
  func.func @transform_23(%arg0: i32) -> (i32, i32) {
    %c0_i32 = arith.constant 0 : i32
    %c0_i32_0 = arith.constant 0 : i32
    %c0_i32_1 = arith.constant 0 : i32
    return %c0_i32, %c0_i32_0 : i32, i32
  }
  func.func @transform_24(%arg0: i32) -> (i32, i32) {
    %c0_i32 = arith.constant 0 : i32
    %c0_i32_0 = arith.constant 0 : i32
    %c0_i32_1 = arith.constant 0 : i32
    return %c0_i32, %c0_i32_0 : i32, i32
  }
  func.func @transform_25(%arg0: i32) -> (i32, i32) {
    %c0_i32 = arith.constant 0 : i32
    %c0_i32_0 = arith.constant 0 : i32
    %c0_i32_1 = arith.constant 0 : i32
    return %c0_i32, %c0_i32_0 : i32, i32
  }
  func.func @transform_26(%arg0: i32) -> (i32, i32) {
    %c0_i32 = arith.constant 0 : i32
    %c0_i32_0 = arith.constant 0 : i32
    %c0_i32_1 = arith.constant 0 : i32
    return %c0_i32, %c0_i32_0 : i32, i32
  }
  func.func @transform_27(%arg0: i32) -> (i32, i32, i32) {
    %c0_i32 = arith.constant 0 : i32
    %c0_i32_0 = arith.constant 0 : i32
    %c0_i32_1 = arith.constant 0 : i32
    return %arg0, %c0_i32, %c0_i32_0 : i32, i32, i32
  }
}

</mosaic_0001>

<llo_original>
// kernel: tpu_custom_call.1
$region0: #{tpu_custom_call.1}
  #allocation0 [shape = 'u32[]', space=smem, size = 0x4, offset = 0x4, fixed_abs, tag = 'smem constant byte address 0x4 - core index']
  #allocation1 [shape = 'u32[144,128]{1,0:T(1,128)}', space=vmem, size = 0x12000, scoped, tag = 'internal scratch']
  #allocation2 [shape = 'f32[8,32]{1,0:T(8,128)}', space=vmem, size = 0x1000, scoped, tag = 'scratch operand']
  %s0 = inlined_call_operand.hbm [shape: f32[2,8,32], index: 0, kind: input, shape index: {}]
  %s1 = inlined_call_operand.vmem [shape: s32[2,8,1], index: 1, kind: input, shape index: {}]
  %s2 = inlined_call_operand.hbm [shape: s32[2,1,8], index: 2, kind: input, shape index: {}]
  %s3 = inlined_call_operand.hbm [shape: f32[8,32], index: 3, kind: input, shape index: {}]
  %s4 = inlined_call_operand.hbm [shape: f32[8,32], index: 4, kind: input, shape index: {}]
  %s5 = inlined_call_operand.vmem [shape: bf16[32,8], index: 5, kind: input, shape index: {}]
  %s6 = inlined_call_operand.vmem [shape: bf16[32,8], index: 6, kind: input, shape index: {}]
  %s7 = inlined_call_operand.vmem [shape: f32[1,32], index: 7, kind: input, shape index: {}]
  %s8 = inlined_call_operand.hbm [shape: f32[1,32], index: 8, kind: input, shape index: {}]
  %s9 = inlined_call_operand.vmem [shape: bf16[32,64], index: 9, kind: input, shape index: {}]
  %s10 = inlined_call_operand.hbm [shape: f32[1,32], index: 10, kind: input, shape index: {}]
  %s11 = inlined_call_operand.hbm [shape: f32[1,32], index: 11, kind: input, shape index: {}]
  %s12 = inlined_call_operand.vmem [shape: bf16[32,32], index: 12, kind: input, shape index: {}]
  %s13 = inlined_call_operand.hbm [shape: f32[1,32], index: 13, kind: input, shape index: {}]
  %s14 = inlined_call_operand.hbm [shape: f32[1,32], index: 14, kind: input, shape index: {}]
  %s15 = inlined_call_operand.vmem [shape: bf16[32,32], index: 15, kind: input, shape index: {}]
  %s16 = inlined_call_operand.hbm [shape: bf16[32,32], index: 16, kind: input, shape index: {}]
  %s17 = inlined_call_operand.vmem [shape: bf16[32,160], index: 17, kind: input, shape index: {}]
  %s18 = inlined_call_operand.hbm [shape: bf16[32,32], index: 18, kind: input, shape index: {}]
  %s19 = inlined_call_operand.hbm [shape: f32[1,32], index: 19, kind: input, shape index: {}]
  %s20 = inlined_call_operand.hbm [shape: f32[1,32], index: 20, kind: input, shape index: {}]
  %s21 = inlined_call_operand.hbm [shape: f32[1,32], index: 21, kind: input, shape index: {}]
  %s22 = inlined_call_operand.vmem [shape: bf16[32,32], index: 22, kind: input, shape index: {}]
  %s23 = inlined_call_operand.hbm [shape: f32[1,32], index: 23, kind: input, shape index: {}]
  %s24 = inlined_call_operand.vmem [shape: bf16[32,160], index: 24, kind: input, shape index: {}]
  %s25 = inlined_call_operand.vmem [shape: bf16[32,32], index: 25, kind: input, shape index: {}]
  %s26 = inlined_call_operand.vmem [shape: f32[1,32], index: 26, kind: input, shape index: {}]
  %s27 = inlined_call_operand.hbm [shape: f32[2,8,32], index: 27, kind: output, shape index: {}]
  %s28 = sld [smem:[#allocation0]]
  $region201: #{tpu_custom_call.1} parent=0
    _
  %s30 = ssub.s32 1, %s28
  %s31 = scalar_select 0, %s30, %s28
  $region1: #{tpu_custom_call.1} parent=0
    #allocation3 [shape = 'u8[8192]{0}', space=vmem, size = 0x2000, scoped, tag = 'input window, operand 0']
    #allocation4 [shape = 's32[2]{0}', space=sflag, size = 0x8, scoped, tag = 'scoped memory for tpu_custom_call.1']
    #allocation5 [shape = 's32[2]{0}', space=sflag, size = 0x8, scoped, tag = 'scoped memory for tpu_custom_call.1']
    #allocation6 [shape = 'u8[1024]{0}', space=vmem, size = 0x400, scoped, tag = 'input window, operand 2']
    #allocation7 [shape = 's32[2]{0}', space=sflag, size = 0x8, scoped, tag = 'scoped memory for tpu_custom_call.1']
    #allocation8 [shape = 'u8[4096]{0}', space=vmem, size = 0x1000, scoped, tag = 'input window, operand 3, single buffered']
    #allocation9 [shape = 'u8[4096]{0}', space=vmem, size = 0x1000, scoped, tag = 'input window, operand 4, single buffered']
    #allocation10 [shape = 's32[1]{0}', space=sflag, size = 0x4, scoped, tag = 'scoped memory for tpu_custom_call.1']
    #allocation11 [shape = 'u8[512]{0}', space=vmem, size = 0x400, scoped, tag = 'input window, operand 8, single buffered']
    #allocation12 [shape = 'u8[512]{0}', space=vmem, size = 0x400, scoped, tag = 'input window, operand 10, single buffered']
    #allocation13 [shape = 's32[1]{0}', space=sflag, size = 0x4, scoped, tag = 'scoped memory for tpu_custom_call.1']
    #allocation14 [shape = 'u8[512]{0}', space=vmem, size = 0x400, scoped, tag = 'input window, operand 11, single buffered']
    #allocation15 [shape = 'u8[512]{0}', space=vmem, size = 0x400, scoped, tag = 'input window, operand 13, single buffered']
    #allocation16 [shape = 's32[1]{0}', space=sflag, size = 0x4, scoped, tag = 'scoped memory for tpu_custom_call.1']
    #allocation17 [shape = 'u8[512]{0}', space=vmem, size = 0x400, scoped, tag = 'input window, operand 14, single buffered']
    #allocation18 [shape = 'u8[8192]{0}', space=vmem, size = 0x2000, scoped, tag = 'input window, operand 16, single buffered']
    #allocation19 [shape = 's32[1]{0}', space=sflag, size = 0x4, scoped, tag = 'scoped memory for tpu_custom_call.1']
    #allocation20 [shape = 'u8[8192]{0}', space=vmem, size = 0x2000, scoped, tag = 'input window, operand 18, single buffered']
    #allocation21 [shape = 'u8[512]{0}', space=vmem, size = 0x400, scoped, tag = 'input window, operand 19, single buffered']
    #allocation22 [shape = 's32[1]{0}', space=sflag, size = 0x4, scoped, tag = 'scoped memory for tpu_custom_call.1']
    #allocation23 [shape = 'u8[512]{0}', space=vmem, size = 0x400, scoped, tag = 'input window, operand 20, single buffered']
    #allocation24 [shape = 'u8[512]{0}', space=vmem, size = 0x400, scoped, tag = 'input window, operand 21, single buffered']
    #allocation25 [shape = 's32[1]{0}', space=sflag, size = 0x4, scoped, tag = 'scoped memory for tpu_custom_call.1']
    #allocation26 [shape = 'u8[512]{0}', space=vmem, size = 0x400, scoped, tag = 'input window, operand 23, single buffered']
    #allocation27 [shape = 'u8[8192]{0}', space=vmem, size = 0x2000, scoped, tag = 'output window, operand 0']
    %32 = vsyncpa [#allocation4], 0
    %s33 = scalar_lea.sflag [#allocation4], 1
    %34 = vsyncpa %s33, 0
    %35 = vsyncpa [#allocation7], 0
    %s36 = scalar_lea.sflag [#allocation7], 1
    %37 = vsyncpa %s36, 0
    %38 = vsyncpa [#allocation10], 0
    %39 = vsyncpa [#allocation13], 0
    %40 = vsyncpa [#allocation16], 0
    %41 = vsyncpa [#allocation19], 0
    %42 = vsyncpa [#allocation22], 0
    %43 = vsyncpa [#allocation25], 0
    %44 = vsyncpa [#allocation5], 0
    %s45 = scalar_lea.sflag [#allocation5], 1
    %46 = vsyncpa %s45, 0
    loop: start=0, step=1, limit=4
    $region2: #{tpu_custom_call.1} parent=1 // loop_pre_header
      _
    $region3: #{tpu_custom_call.1} parent=1 // loop_header
      %s48 = sphi 0, %s52
      %p49 = scmp.ge.s32.totalorder %s48, 4
      %s58 = sphi 0, %s60
      %s61 = sphi 0, %s58
      %s62 = sphi 0, %s61
      %s78 = sphi 0, %s62
      %s84 = sphi 0, %s86
      %s87 = sphi 0, %s84
      %s88 = sphi 0, %s87
      %s104 = sphi 0, %s88
      %s110 = sphi 0, %s112
      %s113 = sphi 0, %s110
      %s114 = sphi 0, %s113
      %s130 = sphi 0, %s114
      %s134 = sphi 0, %s134
      %s136 = sphi 0, %s134
      %s137 = sphi 0, %s136
      %s151 = sphi 0, %s137
      %s155 = sphi 0, %s155
      %s157 = sphi 0, %s155
      %s158 = sphi 0, %s157
      %s172 = sphi 0, %s158
      %s176 = sphi 0, %s176
      %s178 = sphi 0, %s176
      %s179 = sphi 0, %s178
      %s193 = sphi 0, %s179
      %s197 = sphi 0, %s197
      %s199 = sphi 0, %s197
      %s200 = sphi 0, %s199
      %s214 = sphi 0, %s200
      %s218 = sphi 0, %s218
      %s220 = sphi 0, %s218
      %s221 = sphi 0, %s220
      %s235 = sphi 0, %s221
      %s239 = sphi 0, %s239
      %s241 = sphi 0, %s239
      %s242 = sphi 0, %s241
      %s256 = sphi 0, %s242
      %s260 = sphi 0, %s260
      %s262 = sphi 0, %s260
      %s263 = sphi 0, %s262
      %s277 = sphi 0, %s263
      %s281 = sphi 0, %s281
      %s283 = sphi 0, %s281
      %s284 = sphi 0, %s283
      %s298 = sphi 0, %s284
      %s302 = sphi 0, %s302
      %s304 = sphi 0, %s302
      %s305 = sphi 0, %s304
      %s319 = sphi 0, %s305
      %s323 = sphi 0, %s323
      %s325 = sphi 0, %s323
      %s326 = sphi 0, %s325
      %s340 = sphi 0, %s326
      %s344 = sphi 0, %s344
      %s346 = sphi 0, %s344
      %s347 = sphi 0, %s346
      %s361 = sphi 0, %s347
      %s365 = sphi 0, %s365
      %s367 = sphi 0, %s365
      %s368 = sphi 0, %s367
      %s382 = sphi 0, %s368
      %s386 = sphi 0, %s386
      %s388 = sphi 0, %s386
      %s389 = sphi 0, %s388
      %s403 = sphi 0, %s389
      %s407 = sphi 0, %s407
      %s409 = sphi 0, %s407
      %s410 = sphi 0, %s409
      %s424 = sphi 0, %s410
      %s428 = sphi 0, %s428
      %s430 = sphi 0, %s428
      %s431 = sphi 0, %s430
      %s445 = sphi 0, %s431
      %s449 = sphi 0, %s449
      %s451 = sphi 0, %s449
      %s452 = sphi 0, %s451
      %s466 = sphi 0, %s452
      %s470 = sphi 0, %s470
      %s472 = sphi 0, %s470
      %s473 = sphi 0, %s472
      %s487 = sphi 0, %s473
      %s491 = sphi 0, %s491
      %s493 = sphi 0, %s491
      %s494 = sphi 0, %s493
      %s508 = sphi 0, %s494
      %s512 = sphi 0, %s512
      %s514 = sphi 0, %s512
      %s515 = sphi 0, %s514
      %s529 = sphi 0, %s515
      %s533 = sphi 0, %s533
      %s535 = sphi 0, %s533
      %s536 = sphi 0, %s535
      %s550 = sphi 0, %s536
      %s554 = sphi 0, %s554
      %s556 = sphi 0, %s554
      %s557 = sphi 0, %s556
      %s571 = sphi 0, %s557
      %s575 = sphi 0, %s575
      %s577 = sphi 0, %s575
      %s578 = sphi 0, %s577
      %s592 = sphi 0, %s578
      %s596 = sphi 0, %s596
      %s598 = sphi 0, %s596
      %s599 = sphi 0, %s598
      %s613 = sphi 0, %s599
      %s617 = sphi 0, %s617
      %s619 = sphi 0, %s617
      %s620 = sphi 0, %s619
      %s634 = sphi 0, %s620
      %s640 = sphi 0, %s642
      %s643 = sphi 0, %s640
      %s644 = sphi 0, %s643
      %s660 = sphi 0, %s644
    $region4: #{tpu_custom_call.1} parent=1 // loop_header_branch
      %51 = sbr.rel (%p49) target = $region8
    $region5: #{tpu_custom_call.1} parent=1 // loop_body
      %s53 = ssub.s32 %s48, 1
      %s54 = ssub.s32 %s48, 2
      %s55 = sadd.s32 %s48, 1
      %s56 = ssub.s32 %s48, %s55
      %p57 = scmp.eq.s32.totalorder %s56, 0
      %s59 = sadd.s32 %s58, 1
      %s60 = scalar_select %p57, %s58, %s59
      %p63 = pneg %p57
      %p64 = scmp.eq.s32.totalorder %s48, 1
      %p65 = por %p63, %p64
      %p66 = scmp.ne.s32.totalorder %s58, %s61
      %p67 = scmp.eq.s32.totalorder %s48, 0
      %p68 = por %p66, %p67
      %p69 = scmp.ne.s32.totalorder %s58, %s61
      %p70 = scmp.eq.s32.totalorder %s53, 1
      %p71 = por %p69, %p70
      %p72 = scmp.ne.s32.totalorder %s61, %s62
      %p73 = scmp.eq.s32.totalorder %s53, 0
      %p74 = por %p72, %p73
      %p75 = scmp.ne.s32.totalorder %s61, %s62
      %p76 = scmp.eq.s32.totalorder %s54, 1
      %p77 = por %p75, %p76
      %p79 = scmp.ne.s32.totalorder %s62, %s78
      %p80 = scmp.eq.s32.totalorder %s54, 0
      %p81 = por %p79, %p80
      %s82 = ssub.s32 %s48, %s55
      %p83 = scmp.eq.s32.totalorder %s82, 0
      %s85 = sadd.s32 %s84, 1
      %s86 = scalar_select %p83, %s84, %s85
      %p89 = pneg %p83
      %p90 = scmp.eq.s32.totalorder %s48, 1
      %p91 = por %p89, %p90
      %p92 = scmp.ne.s32.totalorder %s84, %s87
      %p93 = scmp.eq.s32.totalorder %s48, 0
      %p94 = por %p92, %p93
      %p95 = scmp.ne.s32.totalorder %s84, %s87
      %p96 = scmp.eq.s32.totalorder %s53, 1
      %p97 = por %p95, %p96
      %p98 = scmp.ne.s32.totalorder %s87, %s88
      %p99 = scmp.eq.s32.totalorder %s53, 0
      %p100 = por %p98, %p99
      %p101 = scmp.ne.s32.totalorder %s87, %s88
      %p102 = scmp.eq.s32.totalorder %s54, 1
      %p103 = por %p101, %p102
      %p105 = scmp.ne.s32.totalorder %s88, %s104
      %p106 = scmp.eq.s32.totalorder %s54, 0
      %p107 = por %p105, %p106
      %s108 = ssub.s32 %s48, %s55
      %p109 = scmp.eq.s32.totalorder %s108, 0
      %s111 = sadd.s32 %s110, 1
      %s112 = scalar_select %p109, %s110, %s111
      %p115 = pneg %p109
      %p116 = scmp.eq.s32.totalorder %s48, 1
      %p117 = por %p115, %p116
      %p118 = scmp.ne.s32.totalorder %s110, %s113
      %p119 = scmp.eq.s32.totalorder %s48, 0
      %p120 = por %p118, %p119
      %p121 = scmp.ne.s32.totalorder %s110, %s113
      %p122 = scmp.eq.s32.totalorder %s53, 1
      %p123 = por %p121, %p122
      %p124 = scmp.ne.s32.totalorder %s113, %s114
      %p125 = scmp.eq.s32.totalorder %s53, 0
      %p126 = por %p124, %p125
      %p127 = scmp.ne.s32.totalorder %s113, %s114
      %p128 = scmp.eq.s32.totalorder %s54, 1
      %p129 = por %p127, %p128
      %p131 = scmp.ne.s32.totalorder %s114, %s130
      %p132 = scmp.eq.s32.totalorder %s54, 0
      %p133 = por %p131, %p132
      %s135 = sadd.s32 %s134, 1
      %p138 = scmp.eq.s32.totalorder %s48, 1
      %p139 = scmp.ne.s32.totalorder %s134, %s136
      %p140 = scmp.eq.s32.totalorder %s48, 0
      %p141 = por %p139, %p140
      %p142 = scmp.ne.s32.totalorder %s134, %s136
      %p143 = scmp.eq.s32.totalorder %s53, 1
      %p144 = por %p142, %p143
      %p145 = scmp.ne.s32.totalorder %s136, %s137
      %p146 = scmp.eq.s32.totalorder %s53, 0
      %p147 = por %p145, %p146
      %p148 = scmp.ne.s32.totalorder %s136, %s137
      %p149 = scmp.eq.s32.totalorder %s54, 1
      %p150 = por %p148, %p149
      %p152 = scmp.ne.s32.totalorder %s137, %s151
      %p153 = scmp.eq.s32.totalorder %s54, 0
      %p154 = por %p152, %p153
      %s156 = sadd.s32 %s155, 1
      %p159 = scmp.eq.s32.totalorder %s48, 1
      %p160 = scmp.ne.s32.totalorder %s155, %s157
      %p161 = scmp.eq.s32.totalorder %s48, 0
      %p162 = por %p160, %p161
      %p163 = scmp.ne.s32.totalorder %s155, %s157
      %p164 = scmp.eq.s32.totalorder %s53, 1
      %p165 = por %p163, %p164
      %p166 = scmp.ne.s32.totalorder %s157, %s158
      %p167 = scmp.eq.s32.totalorder %s53, 0
      %p168 = por %p166, %p167
      %p169 = scmp.ne.s32.totalorder %s157, %s158
      %p170 = scmp.eq.s32.totalorder %s54, 1
      %p171 = por %p169, %p170
      %p173 = scmp.ne.s32.totalorder %s158, %s172
      %p174 = scmp.eq.s32.totalorder %s54, 0
      %p175 = por %p173, %p174
      %s177 = sadd.s32 %s176, 1
      %p180 = scmp.eq.s32.totalorder %s48, 1
      %p181 = scmp.ne.s32.totalorder %s176, %s178
      %p182 = scmp.eq.s32.totalorder %s48, 0
      %p183 = por %p181, %p182
      %p184 = scmp.ne.s32.totalorder %s176, %s178
      %p185 = scmp.eq.s32.totalorder %s53, 1
      %p186 = por %p184, %p185
      %p187 = scmp.ne.s32.totalorder %s178, %s179
      %p188 = scmp.eq.s32.totalorder %s53, 0
      %p189 = por %p187, %p188
      %p190 = scmp.ne.s32.totalorder %s178, %s179
      %p191 = scmp.eq.s32.totalorder %s54, 1
      %p192 = por %p190, %p191
      %p194 = scmp.ne.s32.totalorder %s179, %s193
      %p195 = scmp.eq.s32.totalorder %s54, 0
      %p196 = por %p194, %p195
      %s198 = sadd.s32 %s197, 1
      %p201 = scmp.eq.s32.totalorder %s48, 1
      %p202 = scmp.ne.s32.totalorder %s197, %s199
      %p203 = scmp.eq.s32.totalorder %s48, 0
      %p204 = por %p202, %p203
      %p205 = scmp.ne.s32.totalorder %s197, %s199
      %p206 = scmp.eq.s32.totalorder %s53, 1
      %p207 = por %p205, %p206
      %p208 = scmp.ne.s32.totalorder %s199, %s200
      %p209 = scmp.eq.s32.totalorder %s53, 0
      %p210 = por %p208, %p209
      %p211 = scmp.ne.s32.totalorder %s199, %s200
      %p212 = scmp.eq.s32.totalorder %s54, 1
      %p213 = por %p211, %p212
      %p215 = scmp.ne.s32.totalorder %s200, %s214
      %p216 = scmp.eq.s32.totalorder %s54, 0
      %p217 = por %p215, %p216
      %s219 = sadd.s32 %s218, 1
      %p222 = scmp.eq.s32.totalorder %s48, 1
      %p223 = scmp.ne.s32.totalorder %s218, %s220
      %p224 = scmp.eq.s32.totalorder %s48, 0
      %p225 = por %p223, %p224
      %p226 = scmp.ne.s32.totalorder %s218, %s220
      %p227 = scmp.eq.s32.totalorder %s53, 1
      %p228 = por %p226, %p227
      %p229 = scmp.ne.s32.totalorder %s220, %s221
      %p230 = scmp.eq.s32.totalorder %s53, 0
      %p231 = por %p229, %p230
      %p232 = scmp.ne.s32.totalorder %s220, %s221
      %p233 = scmp.eq.s32.totalorder %s54, 1
      %p234 = por %p232, %p233
      %p236 = scmp.ne.s32.totalorder %s221, %s235
      %p237 = scmp.eq.s32.totalorder %s54, 0
      %p238 = por %p236, %p237
      %s240 = sadd.s32 %s239, 1
      %p243 = scmp.eq.s32.totalorder %s48, 1
      %p244 = scmp.ne.s32.totalorder %s239, %s241
      %p245 = scmp.eq.s32.totalorder %s48, 0
      %p246 = por %p244, %p245
      %p247 = scmp.ne.s32.totalorder %s239, %s241
      %p248 = scmp.eq.s32.totalorder %s53, 1
      %p249 = por %p247, %p248
      %p250 = scmp.ne.s32.totalorder %s241, %s242
      %p251 = scmp.eq.s32.totalorder %s53, 0
      %p252 = por %p250, %p251
      %p253 = scmp.ne.s32.totalorder %s241, %s242
      %p254 = scmp.eq.s32.totalorder %s54, 1
      %p255 = por %p253, %p254
      %p257 = scmp.ne.s32.totalorder %s242, %s256
      %p258 = scmp.eq.s32.totalorder %s54, 0
      %p259 = por %p257, %p258
      %s261 = sadd.s32 %s260, 1
      %p264 = scmp.eq.s32.totalorder %s48, 1
      %p265 = scmp.ne.s32.totalorder %s260, %s262
      %p266 = scmp.eq.s32.totalorder %s48, 0
      %p267 = por %p265, %p266
      %p268 = scmp.ne.s32.totalorder %s260, %s262
      %p269 = scmp.eq.s32.totalorder %s53, 1
      %p270 = por %p268, %p269
      %p271 = scmp.ne.s32.totalorder %s262, %s263
      %p272 = scmp.eq.s32.totalorder %s53, 0
      %p273 = por %p271, %p272
      %p274 = scmp.ne.s32.totalorder %s262, %s263
      %p275 = scmp.eq.s32.totalorder %s54, 1
      %p276 = por %p274, %p275
      %p278 = scmp.ne.s32.totalorder %s263, %s277
      %p279 = scmp.eq.s32.totalorder %s54, 0
      %p280 = por %p278, %p279
      %s282 = sadd.s32 %s281, 1
      %p285 = scmp.eq.s32.totalorder %s48, 1
      %p286 = scmp.ne.s32.totalorder %s281, %s283
      %p287 = scmp.eq.s32.totalorder %s48, 0
      %p288 = por %p286, %p287
      %p289 = scmp.ne.s32.totalorder %s281, %s283
      %p290 = scmp.eq.s32.totalorder %s53, 1
      %p291 = por %p289, %p290
      %p292 = scmp.ne.s32.totalorder %s283, %s284
      %p293 = scmp.eq.s32.totalorder %s53, 0
      %p294 = por %p292, %p293
      %p295 = scmp.ne.s32.totalorder %s283, %s284
      %p296 = scmp.eq.s32.totalorder %s54, 1
      %p297 = por %p295, %p296
      %p299 = scmp.ne.s32.totalorder %s284, %s298
      %p300 = scmp.eq.s32.totalorder %s54, 0
      %p301 = por %p299, %p300
      %s303 = sadd.s32 %s302, 1
      %p306 = scmp.eq.s32.totalorder %s48, 1
      %p307 = scmp.ne.s32.totalorder %s302, %s304
      %p308 = scmp.eq.s32.totalorder %s48, 0
      %p309 = por %p307, %p308
      %p310 = scmp.ne.s32.totalorder %s302, %s304
      %p311 = scmp.eq.s32.totalorder %s53, 1
      %p312 = por %p310, %p311
      %p313 = scmp.ne.s32.totalorder %s304, %s305
      %p314 = scmp.eq.s32.totalorder %s53, 0
      %p315 = por %p313, %p314
      %p316 = scmp.ne.s32.totalorder %s304, %s305
      %p317 = scmp.eq.s32.totalorder %s54, 1
      %p318 = por %p316, %p317
      %p320 = scmp.ne.s32.totalorder %s305, %s319
      %p321 = scmp.eq.s32.totalorder %s54, 0
      %p322 = por %p320, %p321
      %s324 = sadd.s32 %s323, 1
      %p327 = scmp.eq.s32.totalorder %s48, 1
      %p328 = scmp.ne.s32.totalorder %s323, %s325
      %p329 = scmp.eq.s32.totalorder %s48, 0
      %p330 = por %p328, %p329
      %p331 = scmp.ne.s32.totalorder %s323, %s325
      %p332 = scmp.eq.s32.totalorder %s53, 1
      %p333 = por %p331, %p332
      %p334 = scmp.ne.s32.totalorder %s325, %s326
      %p335 = scmp.eq.s32.totalorder %s53, 0
      %p336 = por %p334, %p335
      %p337 = scmp.ne.s32.totalorder %s325, %s326
      %p338 = scmp.eq.s32.totalorder %s54, 1
      %p339 = por %p337, %p338
      %p341 = scmp.ne.s32.totalorder %s326, %s340
      %p342 = scmp.eq.s32.totalorder %s54, 0
      %p343 = por %p341, %p342
      %s345 = sadd.s32 %s344, 1
      %p348 = scmp.eq.s32.totalorder %s48, 1
      %p349 = scmp.ne.s32.totalorder %s344, %s346
      %p350 = scmp.eq.s32.totalorder %s48, 0
      %p351 = por %p349, %p350
      %p352 = scmp.ne.s32.totalorder %s344, %s346
      %p353 = scmp.eq.s32.totalorder %s53, 1
      %p354 = por %p352, %p353
      %p355 = scmp.ne.s32.totalorder %s346, %s347
      %p356 = scmp.eq.s32.totalorder %s53, 0
      %p357 = por %p355, %p356
      %p358 = scmp.ne.s32.totalorder %s346, %s347
      %p359 = scmp.eq.s32.totalorder %s54, 1
      %p360 = por %p358, %p359
      %p362 = scmp.ne.s32.totalorder %s347, %s361
      %p363 = scmp.eq.s32.totalorder %s54, 0
      %p364 = por %p362, %p363
      %s366 = sadd.s32 %s365, 1
      %p369 = scmp.eq.s32.totalorder %s48, 1
      %p370 = scmp.ne.s32.totalorder %s365, %s367
      %p371 = scmp.eq.s32.totalorder %s48, 0
      %p372 = por %p370, %p371
      %p373 = scmp.ne.s32.totalorder %s365, %s367
      %p374 = scmp.eq.s32.totalorder %s53, 1
      %p375 = por %p373, %p374
      %p376 = scmp.ne.s32.totalorder %s367, %s368
      %p377 = scmp.eq.s32.totalorder %s53, 0
      %p378 = por %p376, %p377
      %p379 = scmp.ne.s32.totalorder %s367, %s368
      %p380 = scmp.eq.s32.totalorder %s54, 1
      %p381 = por %p379, %p380
      %p383 = scmp.ne.s32.totalorder %s368, %s382
      %p384 = scmp.eq.s32.totalorder %s54, 0
      %p385 = por %p383, %p384
      %s387 = sadd.s32 %s386, 1
      %p390 = scmp.eq.s32.totalorder %s48, 1
      %p391 = scmp.ne.s32.totalorder %s386, %s388
      %p392 = scmp.eq.s32.totalorder %s48, 0
      %p393 = por %p391, %p392
      %p394 = scmp.ne.s32.totalorder %s386, %s388
      %p395 = scmp.eq.s32.totalorder %s53, 1
      %p396 = por %p394, %p395
      %p397 = scmp.ne.s32.totalorder %s388, %s389
      %p398 = scmp.eq.s32.totalorder %s53, 0
      %p399 = por %p397, %p398
      %p400 = scmp.ne.s32.totalorder %s388, %s389
      %p401 = scmp.eq.s32.totalorder %s54, 1
      %p402 = por %p400, %p401
      %p404 = scmp.ne.s32.totalorder %s389, %s403
      %p405 = scmp.eq.s32.totalorder %s54, 0
      %p406 = por %p404, %p405
      %s408 = sadd.s32 %s407, 1
      %p411 = scmp.eq.s32.totalorder %s48, 1
      %p412 = scmp.ne.s32.totalorder %s407, %s409
      %p413 = scmp.eq.s32.totalorder %s48, 0
      %p414 = por %p412, %p413
      %p415 = scmp.ne.s32.totalorder %s407, %s409
      %p416 = scmp.eq.s32.totalorder %s53, 1
      %p417 = por %p415, %p416
      %p418 = scmp.ne.s32.totalorder %s409, %s410
      %p419 = scmp.eq.s32.totalorder %s53, 0
      %p420 = por %p418, %p419
      %p421 = scmp.ne.s32.totalorder %s409, %s410
      %p422 = scmp.eq.s32.totalorder %s54, 1
      %p423 = por %p421, %p422
      %p425 = scmp.ne.s32.totalorder %s410, %s424
      %p426 = scmp.eq.s32.totalorder %s54, 0
      %p427 = por %p425, %p426
      %s429 = sadd.s32 %s428, 1
      %p432 = scmp.eq.s32.totalorder %s48, 1
      %p433 = scmp.ne.s32.totalorder %s428, %s430
      %p434 = scmp.eq.s32.totalorder %s48, 0
      %p435 = por %p433, %p434
      %p436 = scmp.ne.s32.totalorder %s428, %s430
      %p437 = scmp.eq.s32.totalorder %s53, 1
      %p438 = por %p436, %p437
      %p439 = scmp.ne.s32.totalorder %s430, %s431
      %p440 = scmp.eq.s32.totalorder %s53, 0
      %p441 = por %p439, %p440
      %p442 = scmp.ne.s32.totalorder %s430, %s431
      %p443 = scmp.eq.s32.totalorder %s54, 1
      %p444 = por %p442, %p443
      %p446 = scmp.ne.s32.totalorder %s431, %s445
      %p447 = scmp.eq.s32.totalorder %s54, 0
      %p448 = por %p446, %p447
      %s450 = sadd.s32 %s449, 1
      %p453 = scmp.eq.s32.totalorder %s48, 1
      %p454 = scmp.ne.s32.totalorder %s449, %s451
      %p455 = scmp.eq.s32.totalorder %s48, 0
      %p456 = por %p454, %p455
      %p457 = scmp.ne.s32.totalorder %s449, %s451
      %p458 = scmp.eq.s32.totalorder %s53, 1
      %p459 = por %p457, %p458
      %p460 = scmp.ne.s32.totalorder %s451, %s452
      %p461 = scmp.eq.s32.totalorder %s53, 0
      %p462 = por %p460, %p461
      %p463 = scmp.ne.s32.totalorder %s451, %s452
      %p464 = scmp.eq.s32.totalorder %s54, 1
      %p465 = por %p463, %p464
      %p467 = scmp.ne.s32.totalorder %s452, %s466
      %p468 = scmp.eq.s32.totalorder %s54, 0
      %p469 = por %p467, %p468
      %s471 = sadd.s32 %s470, 1
      %p474 = scmp.eq.s32.totalorder %s48, 1
      %p475 = scmp.ne.s32.totalorder %s470, %s472
      %p476 = scmp.eq.s32.totalorder %s48, 0
      %p477 = por %p475, %p476
      %p478 = scmp.ne.s32.totalorder %s470, %s472
      %p479 = scmp.eq.s32.totalorder %s53, 1
      %p480 = por %p478, %p479
      %p481 = scmp.ne.s32.totalorder %s472, %s473
      %p482 = scmp.eq.s32.totalorder %s53, 0
      %p483 = por %p481, %p482
      %p484 = scmp.ne.s32.totalorder %s472, %s473
      %p485 = scmp.eq.s32.totalorder %s54, 1
      %p486 = por %p484, %p485
      %p488 = scmp.ne.s32.totalorder %s473, %s487
      %p489 = scmp.eq.s32.totalorder %s54, 0
      %p490 = por %p488, %p489
      %s492 = sadd.s32 %s491, 1
      %p495 = scmp.eq.s32.totalorder %s48, 1
      %p496 = scmp.ne.s32.totalorder %s491, %s493
      %p497 = scmp.eq.s32.totalorder %s48, 0
      %p498 = por %p496, %p497
      %p499 = scmp.ne.s32.totalorder %s491, %s493
      %p500 = scmp.eq.s32.totalorder %s53, 1
      %p501 = por %p499, %p500
      %p502 = scmp.ne.s32.totalorder %s493, %s494
      %p503 = scmp.eq.s32.totalorder %s53, 0
      %p504 = por %p502, %p503
      %p505 = scmp.ne.s32.totalorder %s493, %s494
      %p506 = scmp.eq.s32.totalorder %s54, 1
      %p507 = por %p505, %p506
      %p509 = scmp.ne.s32.totalorder %s494, %s508
      %p510 = scmp.eq.s32.totalorder %s54, 0
      %p511 = por %p509, %p510
      %s513 = sadd.s32 %s512, 1
      %p516 = scmp.eq.s32.totalorder %s48, 1
      %p517 = scmp.ne.s32.totalorder %s512, %s514
      %p518 = scmp.eq.s32.totalorder %s48, 0
      %p519 = por %p517, %p518
      %p520 = scmp.ne.s32.totalorder %s512, %s514
      %p521 = scmp.eq.s32.totalorder %s53, 1
      %p522 = por %p520, %p521
      %p523 = scmp.ne.s32.totalorder %s514, %s515
      %p524 = scmp.eq.s32.totalorder %s53, 0
      %p525 = por %p523, %p524
      %p526 = scmp.ne.s32.totalorder %s514, %s515
      %p527 = scmp.eq.s32.totalorder %s54, 1
      %p528 = por %p526, %p527
      %p530 = scmp.ne.s32.totalorder %s515, %s529
      %p531 = scmp.eq.s32.totalorder %s54, 0
      %p532 = por %p530, %p531
      %s534 = sadd.s32 %s533, 1
      %p537 = scmp.eq.s32.totalorder %s48, 1
      %p538 = scmp.ne.s32.totalorder %s533, %s535
      %p539 = scmp.eq.s32.totalorder %s48, 0
      %p540 = por %p538, %p539
      %p541 = scmp.ne.s32.totalorder %s533, %s535
      %p542 = scmp.eq.s32.totalorder %s53, 1
      %p543 = por %p541, %p542
      %p544 = scmp.ne.s32.totalorder %s535, %s536
      %p545 = scmp.eq.s32.totalorder %s53, 0
      %p546 = por %p544, %p545
      %p547 = scmp.ne.s32.totalorder %s535, %s536
      %p548 = scmp.eq.s32.totalorder %s54, 1
      %p549 = por %p547, %p548
      %p551 = scmp.ne.s32.totalorder %s536, %s550
      %p552 = scmp.eq.s32.totalorder %s54, 0
      %p553 = por %p551, %p552
      %s555 = sadd.s32 %s554, 1
      %p558 = scmp.eq.s32.totalorder %s48, 1
      %p559 = scmp.ne.s32.totalorder %s554, %s556
      %p560 = scmp.eq.s32.totalorder %s48, 0
      %p561 = por %p559, %p560
      %p562 = scmp.ne.s32.totalorder %s554, %s556
      %p563 = scmp.eq.s32.totalorder %s53, 1
      %p564 = por %p562, %p563
      %p565 = scmp.ne.s32.totalorder %s556, %s557
      %p566 = scmp.eq.s32.totalorder %s53, 0
      %p567 = por %p565, %p566
      %p568 = scmp.ne.s32.totalorder %s556, %s557
      %p569 = scmp.eq.s32.totalorder %s54, 1
      %p570 = por %p568, %p569
      %p572 = scmp.ne.s32.totalorder %s557, %s571
      %p573 = scmp.eq.s32.totalorder %s54, 0
      %p574 = por %p572, %p573
      %s576 = sadd.s32 %s575, 1
      %p579 = scmp.eq.s32.totalorder %s48, 1
      %p580 = scmp.ne.s32.totalorder %s575, %s577
      %p581 = scmp.eq.s32.totalorder %s48, 0
      %p582 = por %p580, %p581
      %p583 = scmp.ne.s32.totalorder %s575, %s577
      %p584 = scmp.eq.s32.totalorder %s53, 1
      %p585 = por %p583, %p584
      %p586 = scmp.ne.s32.totalorder %s577, %s578
      %p587 = scmp.eq.s32.totalorder %s53, 0
      %p588 = por %p586, %p587
      %p589 = scmp.ne.s32.totalorder %s577, %s578
      %p590 = scmp.eq.s32.totalorder %s54, 1
      %p591 = por %p589, %p590
      %p593 = scmp.ne.s32.totalorder %s578, %s592
      %p594 = scmp.eq.s32.totalorder %s54, 0
      %p595 = por %p593, %p594
      %s597 = sadd.s32 %s596, 1
      %p600 = scmp.eq.s32.totalorder %s48, 1
      %p601 = scmp.ne.s32.totalorder %s596, %s598
      %p602 = scmp.eq.s32.totalorder %s48, 0
      %p603 = por %p601, %p602
      %p604 = scmp.ne.s32.totalorder %s596, %s598
      %p605 = scmp.eq.s32.totalorder %s53, 1
      %p606 = por %p604, %p605
      %p607 = scmp.ne.s32.totalorder %s598, %s599
      %p608 = scmp.eq.s32.totalorder %s53, 0
      %p609 = por %p607, %p608
      %p610 = scmp.ne.s32.totalorder %s598, %s599
      %p611 = scmp.eq.s32.totalorder %s54, 1
      %p612 = por %p610, %p611
      %p614 = scmp.ne.s32.totalorder %s599, %s613
      %p615 = scmp.eq.s32.totalorder %s54, 0
      %p616 = por %p614, %p615
      %s618 = sadd.s32 %s617, 1
      %p621 = scmp.eq.s32.totalorder %s48, 1
      %p622 = scmp.ne.s32.totalorder %s617, %s619
      %p623 = scmp.eq.s32.totalorder %s48, 0
      %p624 = por %p622, %p623
      %p625 = scmp.ne.s32.totalorder %s617, %s619
      %p626 = scmp.eq.s32.totalorder %s53, 1
      %p627 = por %p625, %p626
      %p628 = scmp.ne.s32.totalorder %s619, %s620
      %p629 = scmp.eq.s32.totalorder %s53, 0
      %p630 = por %p628, %p629
      %p631 = scmp.ne.s32.totalorder %s619, %s620
      %p632 = scmp.eq.s32.totalorder %s54, 1
      %p633 = por %p631, %p632
      %p635 = scmp.ne.s32.totalorder %s620, %s634
      %p636 = scmp.eq.s32.totalorder %s54, 0
      %p637 = por %p635, %p636
      %s638 = ssub.s32 %s48, %s55
      %p639 = scmp.eq.s32.totalorder %s638, 0
      %s641 = sadd.s32 %s640, 1
      %s642 = scalar_select %p639, %s640, %s641
      %p645 = pneg %p639
      %p646 = scmp.eq.s32.totalorder %s48, 1
      %p647 = por %p645, %p646
      %p648 = scmp.ne.s32.totalorder %s640, %s643
      %p649 = scmp.eq.s32.totalorder %s48, 0
      %p650 = por %p648, %p649
      %p651 = scmp.ne.s32.totalorder %s640, %s643
      %p652 = scmp.eq.s32.totalorder %s53, 1
      %p653 = por %p651, %p652
      %p654 = scmp.ne.s32.totalorder %s643, %s644
      %p655 = scmp.eq.s32.totalorder %s53, 0
      %p656 = por %p654, %p655
      %p657 = scmp.ne.s32.totalorder %s643, %s644
      %p658 = scmp.eq.s32.totalorder %s54, 1
      %p659 = por %p657, %p658
      %p661 = scmp.ne.s32.totalorder %s644, %s660
      %p662 = scmp.eq.s32.totalorder %s54, 0
      %p663 = por %p661, %p662
      %p664 = scmp.le.s32.totalorder 1, %s48
      %p665 = scmp.lt.s32.totalorder %s48, 3
      %p666 = pnand %p664, %p665
      %p667 = pneg %p666
      // Predicated region
      $region9: #{tpu_custom_call.1} parent=5 // pred_check
        _
      $region10: #{tpu_custom_call.1} parent=5 // pred_check_branch
        %669 = sbr.rel (%p666) target = $region12
      $region11: #{tpu_custom_call.1} parent=5 // pred_region
        %s670 = ssub.s32 %s48, 1
        // Predicated region
        $region13: #{tpu_custom_call.1} parent=11 // pred_check
          %p671 = pneg %p147
        $region14: #{tpu_custom_call.1} parent=11 // pred_check_branch
          %673 = sbr.rel (%p671) target = $region16
        $region15: #{tpu_custom_call.1} parent=11 // pred_region
          %s675 = ssub.s32 128, 128
          %676 = vsyncadd [#allocation7], %s675
          %s678 = sshll.u32 [#allocation8], 4
          %s679 = int_to_ptr.vmem [resolvable:$true] %s678
          %681 = dma.hbm_to_vmem [thread:$0]  %s3, 128, %s679, [#allocation7]
        $region16: #{tpu_custom_call.1} parent=11 // pred_fallthru
          _
        // Predicated region
        $region17: #{tpu_custom_call.1} parent=11 // pred_check
          %p682 = pneg %p168
        $region18: #{tpu_custom_call.1} parent=11 // pred_check_branch
          %684 = sbr.rel (%p682) target = $region20
        $region19: #{tpu_custom_call.1} parent=11 // pred_region
          %s686 = ssub.s32 128, 128
          %687 = vsyncadd [#allocation10], %s686
          %s689 = sshll.u32 [#allocation9], 4
          %s690 = int_to_ptr.vmem [resolvable:$true] %s689
          %692 = dma.hbm_to_vmem [thread:$0]  %s4, 128, %s690, [#allocation10]
        $region20: #{tpu_custom_call.1} parent=11 // pred_fallthru
          _
        // Predicated region
        $region21: #{tpu_custom_call.1} parent=11 // pred_check
          %p693 = pneg %p189
        $region22: #{tpu_custom_call.1} parent=11 // pred_check_branch
          %695 = sbr.rel (%p693) target = $region24
        $region23: #{tpu_custom_call.1} parent=11 // pred_region
          _
        $region24: #{tpu_custom_call.1} parent=11 // pred_fallthru
          _
        // Predicated region
        $region25: #{tpu_custom_call.1} parent=11 // pred_check
          %p696 = pneg %p210
        $region26: #{tpu_custom_call.1} parent=11 // pred_check_branch
          %698 = sbr.rel (%p696) target = $region28
        $region27: #{tpu_custom_call.1} parent=11 // pred_region
          _
        $region28: #{tpu_custom_call.1} parent=11 // pred_fallthru
          _
        // Predicated region
        $region29: #{tpu_custom_call.1} parent=11 // pred_check
          %p699 = pneg %p231
        $region30: #{tpu_custom_call.1} parent=11 // pred_check_branch
          %701 = sbr.rel (%p699) target = $region32
        $region31: #{tpu_custom_call.1} parent=11 // pred_region
          _
        $region32: #{tpu_custom_call.1} parent=11 // pred_fallthru
          _
        // Predicated region
        $region33: #{tpu_custom_call.1} parent=11 // pred_check
          %p702 = pneg %p252
        $region34: #{tpu_custom_call.1} parent=11 // pred_check_branch
          %704 = sbr.rel (%p702) target = $region36
        $region35: #{tpu_custom_call.1} parent=11 // pred_region
          %s706 = ssub.s32 16, 16
          %707 = vsyncadd [#allocation10], %s706
          %s709 = sshll.u32 [#allocation11], 4
          %s710 = int_to_ptr.vmem [resolvable:$true] %s709
          %712 = dma.hbm_to_vmem [thread:$0]  %s8, 16, %s710, [#allocation10]
        $region36: #{tpu_custom_call.1} parent=11 // pred_fallthru
          _
        // Predicated region
        $region37: #{tpu_custom_call.1} parent=11 // pred_check
          %p713 = pneg %p273
        $region38: #{tpu_custom_call.1} parent=11 // pred_check_branch
          %715 = sbr.rel (%p713) target = $region40
        $region39: #{tpu_custom_call.1} parent=11 // pred_region
          _
        $region40: #{tpu_custom_call.1} parent=11 // pred_fallthru
          _
        // Predicated region
        $region41: #{tpu_custom_call.1} parent=11 // pred_check
          %p716 = pneg %p294
        $region42: #{tpu_custom_call.1} parent=11 // pred_check_branch
          %718 = sbr.rel (%p716) target = $region44
        $region43: #{tpu_custom_call.1} parent=11 // pred_region
          %s720 = ssub.s32 16, 16
          %721 = vsyncadd [#allocation13], %s720
          %s723 = sshll.u32 [#allocation12], 4
          %s724 = int_to_ptr.vmem [resolvable:$true] %s723
          %726 = dma.hbm_to_vmem [thread:$0]  %s10, 16, %s724, [#allocation13]
        $region44: #{tpu_custom_call.1} parent=11 // pred_fallthru
          _
        // Predicated region
        $region45: #{tpu_custom_call.1} parent=11 // pred_check
          %p727 = pneg %p315
        $region46: #{tpu_custom_call.1} parent=11 // pred_check_branch
          %729 = sbr.rel (%p727) target = $region48
        $region47: #{tpu_custom_call.1} parent=11 // pred_region
          %s731 = ssub.s32 16, 16
          %732 = vsyncadd [#allocation13], %s731
          %s734 = sshll.u32 [#allocation14], 4
          %s735 = int_to_ptr.vmem [resolvable:$true] %s734
          %737 = dma.hbm_to_vmem [thread:$0]  %s11, 16, %s735, [#allocation13]
        $region48: #{tpu_custom_call.1} parent=11 // pred_fallthru
          _
        // Predicated region
        $region49: #{tpu_custom_call.1} parent=11 // pred_check
          %p738 = pneg %p336
        $region50: #{tpu_custom_call.1} parent=11 // pred_check_branch
          %740 = sbr.rel (%p738) target = $region52
        $region51: #{tpu_custom_call.1} parent=11 // pred_region
          _
        $region52: #{tpu_custom_call.1} parent=11 // pred_fallthru
          _
        // Predicated region
        $region53: #{tpu_custom_call.1} parent=11 // pred_check
          %p741 = pneg %p357
        $region54: #{tpu_custom_call.1} parent=11 // pred_check_branch
          %743 = sbr.rel (%p741) target = $region56
        $region55: #{tpu_custom_call.1} parent=11 // pred_region
          %s745 = ssub.s32 16, 16
          %746 = vsyncadd [#allocation16], %s745
          %s748 = sshll.u32 [#allocation15], 4
          %s749 = int_to_ptr.vmem [resolvable:$true] %s748
          %751 = dma.hbm_to_vmem [thread:$0]  %s13, 16, %s749, [#allocation16]
        $region56: #{tpu_custom_call.1} parent=11 // pred_fallthru
          _
        // Predicated region
        $region57: #{tpu_custom_call.1} parent=11 // pred_check
          %p752 = pneg %p378
        $region58: #{tpu_custom_call.1} parent=11 // pred_check_branch
          %754 = sbr.rel (%p752) target = $region60
        $region59: #{tpu_custom_call.1} parent=11 // pred_region
          %s756 = ssub.s32 16, 16
          %757 = vsyncadd [#allocation16], %s756
          %s759 = sshll.u32 [#allocation17], 4
          %s760 = int_to_ptr.vmem [resolvable:$true] %s759
          %762 = dma.hbm_to_vmem [thread:$0]  %s14, 16, %s760, [#allocation16]
        $region60: #{tpu_custom_call.1} parent=11 // pred_fallthru
          _
        // Predicated region
        $region61: #{tpu_custom_call.1} parent=11 // pred_check
          %p763 = pneg %p399
        $region62: #{tpu_custom_call.1} parent=11 // pred_check_branch
          %765 = sbr.rel (%p763) target = $region64
        $region63: #{tpu_custom_call.1} parent=11 // pred_region
          _
        $region64: #{tpu_custom_call.1} parent=11 // pred_fallthru
          _
        // Predicated region
        $region65: #{tpu_custom_call.1} parent=11 // pred_check
          %p766 = pneg %p420
        $region66: #{tpu_custom_call.1} parent=11 // pred_check_branch
          %768 = sbr.rel (%p766) target = $region68
        $region67: #{tpu_custom_call.1} parent=11 // pred_region
          %s770 = ssub.s32 256, 256
          %771 = vsyncadd [#allocation19], %s770
          %s772 = sshll.u32 [#allocation18], 4
          %s773 = int_to_ptr.vmem [resolvable:$true] %s772
          %778 = dma.hbm_to_vmem [thread:$0]  %s16, 256, %s773, [#allocation19], 64, 64, 4
        $region68: #{tpu_custom_call.1} parent=11 // pred_fallthru
          _
        // Predicated region
        $region69: #{tpu_custom_call.1} parent=11 // pred_check
          %p779 = pneg %p441
        $region70: #{tpu_custom_call.1} parent=11 // pred_check_branch
          %781 = sbr.rel (%p779) target = $region72
        $region71: #{tpu_custom_call.1} parent=11 // pred_region
          _
        $region72: #{tpu_custom_call.1} parent=11 // pred_fallthru
          _
        // Predicated region
        $region73: #{tpu_custom_call.1} parent=11 // pred_check
          %p782 = pneg %p462
        $region74: #{tpu_custom_call.1} parent=11 // pred_check_branch
          %784 = sbr.rel (%p782) target = $region76
        $region75: #{tpu_custom_call.1} parent=11 // pred_region
          %s786 = ssub.s32 256, 256
          %787 = vsyncadd [#allocation19], %s786
          %s788 = sshll.u32 [#allocation20], 4
          %s789 = int_to_ptr.vmem [resolvable:$true] %s788
          %794 = dma.hbm_to_vmem [thread:$0]  %s18, 256, %s789, [#allocation19], 64, 64, 4
        $region76: #{tpu_custom_call.1} parent=11 // pred_fallthru
          _
        // Predicated region
        $region77: #{tpu_custom_call.1} parent=11 // pred_check
          %p795 = pneg %p483
        $region78: #{tpu_custom_call.1} parent=11 // pred_check_branch
          %797 = sbr.rel (%p795) target = $region80
        $region79: #{tpu_custom_call.1} parent=11 // pred_region
          %s799 = ssub.s32 16, 16
          %800 = vsyncadd [#allocation22], %s799
          %s802 = sshll.u32 [#allocation21], 4
          %s803 = int_to_ptr.vmem [resolvable:$true] %s802
          %805 = dma.hbm_to_vmem [thread:$0]  %s19, 16, %s803, [#allocation22]
        $region80: #{tpu_custom_call.1} parent=11 // pred_fallthru
          _
        // Predicated region
        $region81: #{tpu_custom_call.1} parent=11 // pred_check
          %p806 = pneg %p504
        $region82: #{tpu_custom_call.1} parent=11 // pred_check_branch
          %808 = sbr.rel (%p806) target = $region84
        $region83: #{tpu_custom_call.1} parent=11 // pred_region
          %s810 = ssub.s32 16, 16
          %811 = vsyncadd [#allocation22], %s810
          %s813 = sshll.u32 [#allocation23], 4
          %s814 = int_to_ptr.vmem [resolvable:$true] %s813
          %816 = dma.hbm_to_vmem [thread:$0]  %s20, 16, %s814, [#allocation22]
        $region84: #{tpu_custom_call.1} parent=11 // pred_fallthru
          _
        // Predicated region
        $region85: #{tpu_custom_call.1} parent=11 // pred_check
          %p817 = pneg %p525
        $region86: #{tpu_custom_call.1} parent=11 // pred_check_branch
          %819 = sbr.rel (%p817) target = $region88
        $region87: #{tpu_custom_call.1} parent=11 // pred_region
          %s821 = ssub.s32 16, 16
          %822 = vsyncadd [#allocation25], %s821
          %s824 = sshll.u32 [#allocation24], 4
          %s825 = int_to_ptr.vmem [resolvable:$true] %s824
          %827 = dma.hbm_to_vmem [thread:$0]  %s21, 16, %s825, [#allocation25]
        $region88: #{tpu_custom_call.1} parent=11 // pred_fallthru
          _
        // Predicated region
        $region89: #{tpu_custom_call.1} parent=11 // pred_check
          %p828 = pneg %p546
        $region90: #{tpu_custom_call.1} parent=11 // pred_check_branch
          %830 = sbr.rel (%p828) target = $region92
        $region91: #{tpu_custom_call.1} parent=11 // pred_region
          _
        $region92: #{tpu_custom_call.1} parent=11 // pred_fallthru
          _
        // Predicated region
        $region93: #{tpu_custom_call.1} parent=11 // pred_check
          %p831 = pneg %p567
        $region94: #{tpu_custom_call.1} parent=11 // pred_check_branch
          %833 = sbr.rel (%p831) target = $region96
        $region95: #{tpu_custom_call.1} parent=11 // pred_region
          %s835 = ssub.s32 16, 16
          %836 = vsyncadd [#allocation25], %s835
          %s838 = sshll.u32 [#allocation26], 4
          %s839 = int_to_ptr.vmem [resolvable:$true] %s838
          %841 = dma.hbm_to_vmem [thread:$0]  %s23, 16, %s839, [#allocation25]
        $region96: #{tpu_custom_call.1} parent=11 // pred_fallthru
          _
        // Predicated region
        $region97: #{tpu_custom_call.1} parent=11 // pred_check
          %p842 = pneg %p588
        $region98: #{tpu_custom_call.1} parent=11 // pred_check_branch
          %844 = sbr.rel (%p842) target = $region100
        $region99: #{tpu_custom_call.1} parent=11 // pred_region
          _
        $region100: #{tpu_custom_call.1} parent=11 // pred_fallthru
          _
        // Predicated region
        $region101: #{tpu_custom_call.1} parent=11 // pred_check
          %p845 = pneg %p609
        $region102: #{tpu_custom_call.1} parent=11 // pred_check_branch
          %847 = sbr.rel (%p845) target = $region104
        $region103: #{tpu_custom_call.1} parent=11 // pred_region
          _
        $region104: #{tpu_custom_call.1} parent=11 // pred_fallthru
          _
        // Predicated region
        $region105: #{tpu_custom_call.1} parent=11 // pred_check
          %p848 = pneg %p630
        $region106: #{tpu_custom_call.1} parent=11 // pred_check_branch
          %850 = sbr.rel (%p848) target = $region108
        $region107: #{tpu_custom_call.1} parent=11 // pred_region
          _
        $region108: #{tpu_custom_call.1} parent=11 // pred_fallthru
          _
      $region12: #{tpu_custom_call.1} parent=5 // pred_fallthru
        _
      %p851 = scmp.lt.s32.totalorder %s48, 2
      // Predicated region
      $region109: #{tpu_custom_call.1} parent=5 // pred_check
        %p852 = pneg %p851
      $region110: #{tpu_custom_call.1} parent=5 // pred_check_branch
        %854 = sbr.rel (%p852) target = $region112
      $region111: #{tpu_custom_call.1} parent=5 // pred_region
        // Predicated region
        $region113: #{tpu_custom_call.1} parent=111 // pred_check
          %p855 = pneg %p68
        $region114: #{tpu_custom_call.1} parent=111 // pred_check_branch
          %857 = sbr.rel (%p855) target = $region116
        $region115: #{tpu_custom_call.1} parent=111 // pred_region
          %s858 = sand.u32 %s58, 1
          %s859 = scalar_lea.sflag [#allocation4], %s858
          %s860 = sand.u32 %s58, 1
          %s861 = smul.addr %s860, 8
          %s862 = scalar_lea.vmem [#allocation3], %s861
          %s864 = ssub.s32 128, 128
          %865 = vsyncadd %s859, %s864
          %s866 = smul.addr %s48, 128
          %s867 = scalar_lea.hbm %s0, %s866
          %s869 = sshll.u32 %s862, 4
          %s870 = int_to_ptr.vmem [resolvable:$true] %s869
          %872 = dma.hbm_to_vmem [thread:$0]  %s867, 128, %s870, %s859
        $region116: #{tpu_custom_call.1} parent=111 // pred_fallthru
          _
        // Predicated region
        $region117: #{tpu_custom_call.1} parent=111 // pred_check
          %p873 = pneg %p94
        $region118: #{tpu_custom_call.1} parent=111 // pred_check_branch
          %875 = sbr.rel (%p873) target = $region120
        $region119: #{tpu_custom_call.1} parent=111 // pred_region
          %p876 = scmp.lt.s32.totalorder %s48, 1
          %s877 = scalar_select %p876, %s48, 1
          %s878 = smul.addr %s877, 8
          %s879 = scalar_lea.vmem %s1, %s878
        $region120: #{tpu_custom_call.1} parent=111 // pred_fallthru
          _
        // Predicated region
        $region121: #{tpu_custom_call.1} parent=111 // pred_check
          %p880 = pneg %p120
        $region122: #{tpu_custom_call.1} parent=111 // pred_check_branch
          %882 = sbr.rel (%p880) target = $region124
        $region123: #{tpu_custom_call.1} parent=111 // pred_region
          %s883 = sand.u32 %s48, 1
          %s884 = scalar_lea.sflag [#allocation7], %s883
          %s885 = sand.u32 %s110, 1
          %s886 = scalar_lea.vmem [#allocation6], %s885
          %s888 = ssub.s32 16, 16
          %889 = vsyncadd %s884, %s888
          %s890 = smul.addr %s48, 16
          %s891 = scalar_lea.hbm %s2, %s890
          %s893 = sshll.u32 %s886, 4
          %s894 = int_to_ptr.vmem [resolvable:$true] %s893
          %896 = dma.hbm_to_vmem [thread:$0]  %s891, 16, %s894, %s884
        $region124: #{tpu_custom_call.1} parent=111 // pred_fallthru
          _
      $region112: #{tpu_custom_call.1} parent=5 // pred_fallthru
        _
      %p897 = scmp.le.s32.totalorder 1, %s48
      %p898 = scmp.lt.s32.totalorder %s48, 3
      %p899 = pnand %p897, %p898
      %p900 = pneg %p899
      // Predicated region
      $region125: #{tpu_custom_call.1} parent=5 // pred_check
        _
      $region126: #{tpu_custom_call.1} parent=5 // pred_check_branch
        %902 = sbr.rel (%p899) target = $region128
      $region127: #{tpu_custom_call.1} parent=5 // pred_region
        %s903 = ssub.s32 %s48, 1
        %s904 = sand.u32 %s61, 1
        %s905 = scalar_lea.sflag [#allocation4], %s904
        %s906 = sand.u32 %s61, 1
        %s907 = smul.addr %s906, 8
        %s908 = scalar_lea.vmem [#allocation3], %s907
        // Predicated region
        $region129: #{tpu_custom_call.1} parent=127 // pred_check
          %p909 = pneg %p74
        $region130: #{tpu_custom_call.1} parent=127 // pred_check_branch
          %911 = sbr.rel (%p909) target = $region132
        $region131: #{tpu_custom_call.1} parent=127 // pred_region
          %912 = dma.done %s905, 128
        $region132: #{tpu_custom_call.1} parent=127 // pred_fallthru
          _
        %s913 = sand.u32 %s53, 1
        %s914 = scalar_lea.sflag [#allocation7], %s913
        %s915 = sand.u32 %s113, 1
        %s916 = scalar_lea.vmem [#allocation6], %s915
        // Predicated region
        $region133: #{tpu_custom_call.1} parent=127 // pred_check
          %p917 = pneg %p126
        $region134: #{tpu_custom_call.1} parent=127 // pred_check_branch
          %919 = sbr.rel (%p917) target = $region136
        $region135: #{tpu_custom_call.1} parent=127 // pred_region
          %920 = dma.done %s914, 16
        $region136: #{tpu_custom_call.1} parent=127 // pred_fallthru
          _
        // Predicated region
        $region137: #{tpu_custom_call.1} parent=127 // pred_check
          %p921 = pneg %p147
        $region138: #{tpu_custom_call.1} parent=127 // pred_check_branch
          %923 = sbr.rel (%p921) target = $region140
        $region139: #{tpu_custom_call.1} parent=127 // pred_region
          %924 = dma.done [#allocation7], 128
        $region140: #{tpu_custom_call.1} parent=127 // pred_fallthru
          _
        // Predicated region
        $region141: #{tpu_custom_call.1} parent=127 // pred_check
          %p925 = pneg %p168
        $region142: #{tpu_custom_call.1} parent=127 // pred_check_branch
          %927 = sbr.rel (%p925) target = $region144
        $region143: #{tpu_custom_call.1} parent=127 // pred_region
          %928 = dma.done [#allocation10], 128
        $region144: #{tpu_custom_call.1} parent=127 // pred_fallthru
          _
        // Predicated region
        $region145: #{tpu_custom_call.1} parent=127 // pred_check
          %p929 = pneg %p252
        $region146: #{tpu_custom_call.1} parent=127 // pred_check_branch
          %931 = sbr.rel (%p929) target = $region148
        $region147: #{tpu_custom_call.1} parent=127 // pred_region
          %932 = dma.done [#allocation10], 16
        $region148: #{tpu_custom_call.1} parent=127 // pred_fallthru
          _
        // Predicated region
        $region149: #{tpu_custom_call.1} parent=127 // pred_check
          %p933 = pneg %p294
        $region150: #{tpu_custom_call.1} parent=127 // pred_check_branch
          %935 = sbr.rel (%p933) target = $region152
        $region151: #{tpu_custom_call.1} parent=127 // pred_region
          %936 = dma.done [#allocation13], 16
        $region152: #{tpu_custom_call.1} parent=127 // pred_fallthru
          _
        // Predicated region
        $region153: #{tpu_custom_call.1} parent=127 // pred_check
          %p937 = pneg %p315
        $region154: #{tpu_custom_call.1} parent=127 // pred_check_branch
          %939 = sbr.rel (%p937) target = $region156
        $region155: #{tpu_custom_call.1} parent=127 // pred_region
          %940 = dma.done [#allocation13], 16
        $region156: #{tpu_custom_call.1} parent=127 // pred_fallthru
          _
        // Predicated region
        $region157: #{tpu_custom_call.1} parent=127 // pred_check
          %p941 = pneg %p357
        $region158: #{tpu_custom_call.1} parent=127 // pred_check_branch
          %943 = sbr.rel (%p941) target = $region160
        $region159: #{tpu_custom_call.1} parent=127 // pred_region
          %944 = dma.done [#allocation16], 16
        $region160: #{tpu_custom_call.1} parent=127 // pred_fallthru
          _
        // Predicated region
        $region161: #{tpu_custom_call.1} parent=127 // pred_check
          %p945 = pneg %p378
        $region162: #{tpu_custom_call.1} parent=127 // pred_check_branch
          %947 = sbr.rel (%p945) target = $region164
        $region163: #{tpu_custom_call.1} parent=127 // pred_region
          %948 = dma.done [#allocation16], 16
        $region164: #{tpu_custom_call.1} parent=127 // pred_fallthru
          _
        // Predicated region
        $region165: #{tpu_custom_call.1} parent=127 // pred_check
          %p949 = pneg %p420
        $region166: #{tpu_custom_call.1} parent=127 // pred_check_branch
          %951 = sbr.rel (%p949) target = $region168
        $region167: #{tpu_custom_call.1} parent=127 // pred_region
          %952 = dma.done [#allocation19], 256
        $region168: #{tpu_custom_call.1} parent=127 // pred_fallthru
          _
        // Predicated region
        $region169: #{tpu_custom_call.1} parent=127 // pred_check
          %p953 = pneg %p462
        $region170: #{tpu_custom_call.1} parent=127 // pred_check_branch
          %955 = sbr.rel (%p953) target = $region172
        $region171: #{tpu_custom_call.1} parent=127 // pred_region
          %956 = dma.done [#allocation19], 256
        $region172: #{tpu_custom_call.1} parent=127 // pred_fallthru
          _
        // Predicated region
        $region173: #{tpu_custom_call.1} parent=127 // pred_check
          %p957 = pneg %p483
        $region174: #{tpu_custom_call.1} parent=127 // pred_check_branch
          %959 = sbr.rel (%p957) target = $region176
        $region175: #{tpu_custom_call.1} parent=127 // pred_region
          %960 = dma.done [#allocation22], 16
        $region176: #{tpu_custom_call.1} parent=127 // pred_fallthru
          _
        // Predicated region
        $region177: #{tpu_custom_call.1} parent=127 // pred_check
          %p961 = pneg %p504
        $region178: #{tpu_custom_call.1} parent=127 // pred_check_branch
          %963 = sbr.rel (%p961) target = $region180
        $region179: #{tpu_custom_call.1} parent=127 // pred_region
          %964 = dma.done [#allocation22], 16
        $region180: #{tpu_custom_call.1} parent=127 // pred_fallthru
          _
        // Predicated region
        $region181: #{tpu_custom_call.1} parent=127 // pred_check
          %p965 = pneg %p525
        $region182: #{tpu_custom_call.1} parent=127 // pred_check_branch
          %967 = sbr.rel (%p965) target = $region184
        $region183: #{tpu_custom_call.1} parent=127 // pred_region
          %968 = dma.done [#allocation25], 16
        $region184: #{tpu_custom_call.1} parent=127 // pred_fallthru
          _
        // Predicated region
        $region185: #{tpu_custom_call.1} parent=127 // pred_check
          %p969 = pneg %p567
        $region186: #{tpu_custom_call.1} parent=127 // pred_check_branch
          %971 = sbr.rel (%p969) target = $region188
        $region187: #{tpu_custom_call.1} parent=127 // pred_region
          %972 = dma.done [#allocation25], 16
        $region188: #{tpu_custom_call.1} parent=127 // pred_fallthru
          _
        %s973 = sand.u32 %s61, 1
        %s974 = scalar_lea.sflag [#allocation4], %s973
        %s975 = sand.u32 %s61, 1
        %s976 = smul.addr %s975, 8
        %s977 = scalar_lea.vmem [#allocation3], %s976
        %p978 = pneg %p74
        %p979 = pneg %p71
        %p980 = scmp.lt.s32.totalorder %s53, 1
        %s981 = scalar_select %p980, %s53, 1
        %s982 = smul.addr %s981, 8
        %s983 = scalar_lea.vmem %s1, %s982
        %p984 = pneg %p100
        %p985 = pneg %p97
        %s986 = sand.u32 %s53, 1
        %s987 = scalar_lea.sflag [#allocation7], %s986
        %s988 = sand.u32 %s113, 1
        %s989 = scalar_lea.vmem [#allocation6], %s988
        %p990 = pneg %p126
        %p991 = pneg %p123
        %p992 = pneg %p147
        %p993 = pneg %p144
        %p994 = pneg %p168
        %p995 = pneg %p165
        %p996 = pneg %p189
        %p997 = pneg %p186
        %p998 = pneg %p210
        %p999 = pneg %p207
        %p1000 = pneg %p231
        %p1001 = pneg %p228
        %p1002 = pneg %p252
        %p1003 = pneg %p249
        %p1004 = pneg %p273
        %p1005 = pneg %p270
        %p1006 = pneg %p294
        %p1007 = pneg %p291
        %p1008 = pneg %p315
        %p1009 = pneg %p312
        %p1010 = pneg %p336
        %p1011 = pneg %p333
        %p1012 = pneg %p357
        %p1013 = pneg %p354
        %p1014 = pneg %p378
        %p1015 = pneg %p375
        %p1016 = pneg %p399
        %p1017 = pneg %p396
        %p1018 = pneg %p420
        %p1019 = pneg %p417
        %p1020 = pneg %p441
        %p1021 = pneg %p438
        %p1022 = pneg %p462
        %p1023 = pneg %p459
        %p1024 = pneg %p483
        %p1025 = pneg %p480
        %p1026 = pneg %p504
        %p1027 = pneg %p501
        %p1028 = pneg %p525
        %p1029 = pneg %p522
        %p1030 = pneg %p546
        %p1031 = pneg %p543
        %p1032 = pneg %p567
        %p1033 = pneg %p564
        %p1034 = pneg %p588
        %p1035 = pneg %p585
        %p1036 = pneg %p609
        %p1037 = pneg %p606
        %p1038 = pneg %p630
        %p1039 = pneg %p627
        %p1040 = pneg %p656
        %p1041 = pneg %p653
        %s1042 = sand.u32 %s643, 1
        %s1043 = scalar_lea.sflag [#allocation5], %s1042
        %s1044 = sand.u32 %s643, 1
        %s1045 = smul.addr %s1044, 8
        %s1046 = scalar_lea.vmem [#allocation27], %s1045
        %p1047 = scmp.lt.s32.totalorder %s53, 1
        %s1048 = scalar_select %p1047, %s53, 1
        %s1049 = smul.addr %s1048, 8
        %s1050 = scalar_lea.vmem %s1, %s1049
        %v1052 = vld [vmem:[%s908] sm:$0xff]
        %v1053 = vld [vmem:[%s1050] sm:$0xff]
        %v1054 = vld [vmem:[%s916] sm:$0x1]
        %v1055 = vlaneseq
        %v1056 = vshrl.u32 %v1055, 7
        %v1057 = vlaneseq
        %v1058 = vand.u32 %v1057, 127
        %vm1059 = vcmp.ge.s32.totalorder %v1058, %v1056
        %v1060 = vsub.s32 %v1056, 8
        %vm1061 = vcmp.le.s32.totalorder %v1058, %v1060
        %1062 = vset.pattern.permute.xlu0 0
        %1063 = vperm.xlu0 %1062, %v1053
        %v1064 = vpop.permute.xlu0 %1063
        %v1065 = vlaneseq
        %v1066 = vshrl.u32 %v1065, 7
        %v1067 = vsub.s32 0, %v1066
        %v1068 = vrot.slane %v1054, %v1067
        %v1069 = vsub.s32 %v1064, %v1068
        %vm1070 = vcmp.gt.s32.totalorder %v1069, 0
        %vm1071 = vcmp.lt.s32.totalorder %v1058, %v1056
        %vm1072 = vmand %vm1070, %vm1071
        %vm1073 = vmor %vm1059, %vm1061
        %vm1074 = vmor %vm1073, %vm1072
        %v1075 = vsel %vm1074, 0.0, 1.0
        %vm1076 = vcmask 64512
        %v1077 = vsel %vm1076, %v1075, -inf
        %1078 = vmax.xlane.f32.xlu0 %v1077
        %v1079 = vpop.xlane.xlu0 %1078
        %v1080 = vld [vmem:[%s7] sm:$0x1]
        %v1081 = vld [vmem:[#allocation11] sm:$0x1]
        %vm1082 = vcmask 261120
        %v1083 = vsel %vm1082, %v1052, 0.0
        %1084 = vadd.xlane.f32.xlu0 %v1083
        %v1085 = vpop.xlane.xlu0 %1084
        %v1086 = vrcp.pop 32.0
        %v1087 = vmul.f32 %v1085, %v1086
        %v1088 = vsub.f32 %v1052, %v1087
        %v1089 = vmul.f32 %v1088, %v1088
        %v1090 = vsel %vm1082, %v1089, 0.0
        %1091 = vadd.xlane.f32.xlu0 %v1090
        %v1092 = vpop.xlane.xlu0 %1091
        %v1093 = vmul.f32 %v1092, %v1086
        %v1094 = vadd.f32 %v1093, 1e-05
        %v1095 = vrsqrt.pop %v1094
        %v1096 = vmul.f32 %v1088, %v1095
        %v1098 = vlaneseq
        %v1099 = vshrl.u32 %v1098, 7
        %v1100 = vsub.s32 0, %v1099
        %v1101 = vrot.slane %v1080, %v1100
        %v1103 = vmul.f32 %v1096, %v1101
        %v1105 = vlaneseq
        %v1106 = vshrl.u32 %v1105, 7
        %v1107 = vsub.s32 0, %v1106
        %v1108 = vrot.slane %v1081, %v1107
        %v1110 = vadd.f32 %v1103, %v1108
        %v1111 = vpack.c.bf16 %v1110, %v1110
        %v1112 = vld [vmem:[#allocation15] sm:$0x1]
        %v1113 = vld [vmem:[#allocation17] sm:$0x1]
        %v1115 = vlaneseq
        %v1116 = vshrl.u32 %v1115, 7
        %v1117 = vsub.s32 0, %v1116
        %v1118 = vrot.slane %v1112, %v1117
        %v1120 = vmul.f32 %v1096, %v1118
        %v1122 = vlaneseq
        %v1123 = vshrl.u32 %v1122, 7
        %v1124 = vsub.s32 0, %v1123
        %v1125 = vrot.slane %v1113, %v1124
        %v1127 = vadd.f32 %v1120, %v1125
        %v1128 = vpack.c.bf16 %v1127, %v1127
        %v1129 = vld [vmem:[%s9] sm:$0xf]
        %v1130 = vld [vmem:[%s9 + $0x4] sm:$0xf]
        %v1131 = vld [vmem:[%s9 + $0x8] sm:$0xf]
        %v1132 = vld [vmem:[%s9 + $0xc] sm:$0xf]
        %v1137 = vunpack.c.l.b16 %v1129
        %v1138 = vunpack.c.l.b16 %v1130
        %v1139 = vunpack.c.l.b16 %v1131
        %v1140 = vunpack.c.l.b16 %v1132
        %v1141 = vpack.c.b16 %v1138, %v1137
        %v1142 = vpack.c.b16 %v1140, %v1139
        %v1146 = vsel %vm1082, %v1111, 0
        %1148 = vmatprep.subr.bf16.mxu0 0
        %1149 = vmatpush1.bf16.msra.mxu0 %v1141
        %1150 = vmatprep.subr.bf16.mxu0 0
        %1151 = vmatpush1.bf16.msra.mxu0 %v1142
        %1152 = vmatprep.subr.bf16.mxu0 0
        %1153 = vmatpush1.bf16.msra.mxu0 0
        %1154 = vmatprep.subr.bf16.mxu0 0
        %1155 = vmatpush1.bf16.msra.mxu0 0
        %1156 = vmatprep.subr.bf16.mxu0 0
        %1157 = vmatpush1.bf16.msra.mxu0 0
        %1158 = vmatprep.subr.bf16.mxu0 0
        %1159 = vmatpush1.bf16.msra.mxu0 0
        %1160 = vmatprep.subr.bf16.mxu0 0
        %1161 = vmatpush1.bf16.msra.mxu0 0
        %1162 = vmatprep.subr.bf16.mxu0 0
        %1163 = vmatpush1.bf16.msra.mxu0 0
        %1164 = vmatprep.subr.bf16.mxu0 0
        %1165 = vmatpush1.bf16.msra.mxu0 0
        %1166 = vmatprep.subr.bf16.mxu0 0
        %1167 = vmatpush1.bf16.msra.mxu0 0
        %1168 = vmatprep.subr.bf16.mxu0 0
        %1169 = vmatpush1.bf16.msra.mxu0 0
        %1170 = vmatprep.subr.bf16.mxu0 0
        %1171 = vmatpush1.bf16.msra.mxu0 0
        %1172 = vmatprep.subr.bf16.mxu0 0
        %1173 = vmatpush1.bf16.msra.mxu0 0
        %1174 = vmatprep.subr.bf16.mxu0 0
        %1175 = vmatpush1.bf16.msra.mxu0 0
        %1176 = vmatprep.subr.bf16.mxu0 0
        %1177 = vmatpush1.bf16.msra.mxu0 0
        %1178 = vmatprep.subr.bf16.mxu0 0
        %1179 = vmatpush1.bf16.msra.mxu0 0
        %1180 = vmatprep.mubr.bf16.mxu0 0
        %1181 = vmatmul.mubr.bf16.gmra.mrb[0].mxu0 %v1146
        %v1182 = vpop.f32.mrb[0].mxu0
        %v1183 = vadd.f32 0.0, %v1182
        %v1184 = vpop.f32.mrb[0].mxu0
        %v1185 = vpop.f32.mrb[0].mxu0
        %v1186 = vpop.f32.mrb[0].mxu0
        %1187 = vdwg.mxu0
        %v1188 = vld [vmem:[%s15] sm:$0xf]
        %v1189 = vld [vmem:[%s15 + $0x4] sm:$0xf]
        %v1190 = vld [vmem:[%s15 + $0x8] sm:$0xf]
        %v1191 = vld [vmem:[%s15 + $0xc] sm:$0xf]
        %v1196 = vunpack.c.l.b16 %v1188
        %v1197 = vunpack.c.l.b16 %v1189
        %v1198 = vunpack.c.l.b16 %v1190
        %v1199 = vunpack.c.l.b16 %v1191
        %v1200 = vpack.c.b16 %v1197, %v1196
        %v1201 = vpack.c.b16 %v1199, %v1198
        %v1205 = vsel %vm1082, %v1128, 0
        %1207 = vmatprep.subr.bf16.mxu0 0
        %1208 = vmatpush1.bf16.msra.mxu0 %v1200
        %1209 = vmatprep.subr.bf16.mxu0 0
        %1210 = vmatpush1.bf16.msra.mxu0 %v1201
        %1211 = vmatprep.subr.bf16.mxu0 0
        %1212 = vmatpush1.bf16.msra.mxu0 0
        %1213 = vmatprep.subr.bf16.mxu0 0
        %1214 = vmatpush1.bf16.msra.mxu0 0
        %1215 = vmatprep.subr.bf16.mxu0 0
        %1216 = vmatpush1.bf16.msra.mxu0 0
        %1217 = vmatprep.subr.bf16.mxu0 0
        %1218 = vmatpush1.bf16.msra.mxu0 0
        %1219 = vmatprep.subr.bf16.mxu0 0
        %1220 = vmatpush1.bf16.msra.mxu0 0
        %1221 = vmatprep.subr.bf16.mxu0 0
        %1222 = vmatpush1.bf16.msra.mxu0 0
        %1223 = vmatprep.subr.bf16.mxu0 0
        %1224 = vmatpush1.bf16.msra.mxu0 0
        %1225 = vmatprep.subr.bf16.mxu0 0
        %1226 = vmatpush1.bf16.msra.mxu0 0
        %1227 = vmatprep.subr.bf16.mxu0 0
        %1228 = vmatpush1.bf16.msra.mxu0 0
        %1229 = vmatprep.subr.bf16.mxu0 0
        %1230 = vmatpush1.bf16.msra.mxu0 0
        %1231 = vmatprep.subr.bf16.mxu0 0
        %1232 = vmatpush1.bf16.msra.mxu0 0
        %1233 = vmatprep.subr.bf16.mxu0 0
        %1234 = vmatpush1.bf16.msra.mxu0 0
        %1235 = vmatprep.subr.bf16.mxu0 0
        %1236 = vmatpush1.bf16.msra.mxu0 0
        %1237 = vmatprep.subr.bf16.mxu0 0
        %1238 = vmatpush1.bf16.msra.mxu0 0
        %1239 = vmatprep.mubr.bf16.mxu0 0
        %1240 = vmatmul.mubr.bf16.gmra.mrb[0].mxu0 %v1205
        %v1241 = vpop.f32.mrb[0].mxu0
        %v1242 = vadd.f32 0.0, %v1241
        %v1243 = vpop.f32.mrb[0].mxu0
        %v1244 = vpop.f32.mrb[0].mxu0
        %v1245 = vpop.f32.mrb[0].mxu0
        %1246 = vdwg.mxu0
        %v1247 = vld [vmem:[#allocation12] sm:$0x1]
        %v1249 = vlaneseq
        %v1250 = vshrl.u32 %v1249, 7
        %v1251 = vsub.s32 0, %v1250
        %v1252 = vrot.slane %v1247, %v1251
        %v1254 = vadd.f32 %v1183, %v1252
        %v1255 = vpack.c.bf16 %v1254, %v1254
        %v1256 = vld [vmem:[#allocation14] sm:$0x1]
        %v1258 = vlaneseq
        %v1259 = vshrl.u32 %v1258, 7
        %v1260 = vsub.s32 0, %v1259
        %v1261 = vrot.slane %v1256, %v1260
        %v1263 = vadd.f32 %v1183, %v1261
        %v1264 = vpack.c.bf16 %v1263, %v1263
        %v1265 = vpack.c.bf16 %v1183, %v1183
        %v1266 = vpack.c.bf16 %v1242, %v1242
        %v1267 = vld [vmem:[%s12] sm:$0xf]
        %v1268 = vld [vmem:[%s12 + $0x4] sm:$0xf]
        %v1269 = vld [vmem:[%s12 + $0x8] sm:$0xf]
        %v1270 = vld [vmem:[%s12 + $0xc] sm:$0xf]
        %v1271 = vld [vmem:[#allocation8] sm:$0xff]
        %v1272 = vld [vmem:[#allocation9] sm:$0xff]
        %v1273 = vld [vmem:[%s5] sm:$0xf]
        %v1274 = vld [vmem:[%s5 + $0x4] sm:$0xf]
        %v1275 = vld [vmem:[%s5 + $0x8] sm:$0xf]
        %v1276 = vld [vmem:[%s5 + $0xc] sm:$0xf]
        %v1277 = vld [vmem:[%s6] sm:$0xf]
        %v1278 = vld [vmem:[%s6 + $0x4] sm:$0xf]
        %v1279 = vld [vmem:[%s6 + $0x8] sm:$0xf]
        %v1280 = vld [vmem:[%s6 + $0xc] sm:$0xf]
        %v1285 = vunpack.c.l.b16 %v1267
        %v1286 = vunpack.c.l.b16 %v1268
        %v1287 = vunpack.c.l.b16 %v1269
        %v1288 = vunpack.c.l.b16 %v1270
        %v1289 = vpack.c.b16 %v1286, %v1285
        %v1290 = vpack.c.b16 %v1288, %v1287
        %v1294 = vsel %vm1082, %v1264, 0
        %1296 = vmatprep.subr.bf16.mxu0 0
        %1297 = vmatpush1.bf16.msra.mxu0 %v1289
        %1298 = vmatprep.subr.bf16.mxu0 0
        %1299 = vmatpush1.bf16.msra.mxu0 %v1290
        %1300 = vmatprep.subr.bf16.mxu0 0
        %1301 = vmatpush1.bf16.msra.mxu0 0
        %1302 = vmatprep.subr.bf16.mxu0 0
        %1303 = vmatpush1.bf16.msra.mxu0 0
        %1304 = vmatprep.subr.bf16.mxu0 0
        %1305 = vmatpush1.bf16.msra.mxu0 0
        %1306 = vmatprep.subr.bf16.mxu0 0
        %1307 = vmatpush1.bf16.msra.mxu0 0
        %1308 = vmatprep.subr.bf16.mxu0 0
        %1309 = vmatpush1.bf16.msra.mxu0 0
        %1310 = vmatprep.subr.bf16.mxu0 0
        %1311 = vmatpush1.bf16.msra.mxu0 0
        %1312 = vmatprep.subr.bf16.mxu0 0
        %1313 = vmatpush1.bf16.msra.mxu0 0
        %1314 = vmatprep.subr.bf16.mxu0 0
        %1315 = vmatpush1.bf16.msra.mxu0 0
        %1316 = vmatprep.subr.bf16.mxu0 0
        %1317 = vmatpush1.bf16.msra.mxu0 0
        %1318 = vmatprep.subr.bf16.mxu0 0
        %1319 = vmatpush1.bf16.msra.mxu0 0
        %1320 = vmatprep.subr.bf16.mxu0 0
        %1321 = vmatpush1.bf16.msra.mxu0 0
        %1322 = vmatprep.subr.bf16.mxu0 0
        %1323 = vmatpush1.bf16.msra.mxu0 0
        %1324 = vmatprep.subr.bf16.mxu0 0
        %1325 = vmatpush1.bf16.msra.mxu0 0
        %1326 = vmatprep.subr.bf16.mxu0 0
        %1327 = vmatpush1.bf16.msra.mxu0 0
        %1328 = vmatprep.mubr.bf16.mxu0 0
        %1329 = vmatmul.mubr.bf16.gmra.mrb[0].mxu0 %v1294
        %v1330 = vpop.f32.mrb[0].mxu0
        %v1331 = vadd.f32 0.0, %v1330
        %v1332 = vpop.f32.mrb[0].mxu0
        %v1333 = vpop.f32.mrb[0].mxu0
        %v1334 = vpop.f32.mrb[0].mxu0
        %1335 = vdwg.mxu0
        %v1336 = vmul.f32 %v1331, %v1271
        %v1337 = vpack.c.bf16 %v1336, %v1336
        %v1338 = vmul.f32 %v1331, %v1272
        %v1339 = vpack.c.bf16 %v1338, %v1338
        %v1344 = vunpack.c.l.b16 %v1277
        %v1345 = vunpack.c.l.b16 %v1278
        %v1346 = vunpack.c.l.b16 %v1279
        %v1347 = vunpack.c.l.b16 %v1280
        %v1348 = vpack.c.b16 %v1345, %v1344
        %v1349 = vpack.c.b16 %v1347, %v1346
        %v1353 = vsel %vm1082, %v1339, 0
        %1355 = vmatprep.subr.bf16.mxu0 0
        %1356 = vmatpush1.bf16.msra.mxu0 %v1348
        %1357 = vmatprep.subr.bf16.mxu0 0
        %1358 = vmatpush1.bf16.msra.mxu0 %v1349
        %1359 = vmatprep.subr.bf16.mxu0 0
        %1360 = vmatpush1.bf16.msra.mxu0 0
        %1361 = vmatprep.subr.bf16.mxu0 0
        %1362 = vmatpush1.bf16.msra.mxu0 0
        %1363 = vmatprep.subr.bf16.mxu0 0
        %1364 = vmatpush1.bf16.msra.mxu0 0
        %1365 = vmatprep.subr.bf16.mxu0 0
        %1366 = vmatpush1.bf16.msra.mxu0 0
        %1367 = vmatprep.subr.bf16.mxu0 0
        %1368 = vmatpush1.bf16.msra.mxu0 0
        %1369 = vmatprep.subr.bf16.mxu0 0
        %1370 = vmatpush1.bf16.msra.mxu0 0
        %1371 = vmatprep.subr.bf16.mxu0 0
        %1372 = vmatpush1.bf16.msra.mxu0 0
        %1373 = vmatprep.subr.bf16.mxu0 0
        %1374 = vmatpush1.bf16.msra.mxu0 0
        %1375 = vmatprep.subr.bf16.mxu0 0
        %1376 = vmatpush1.bf16.msra.mxu0 0
        %1377 = vmatprep.subr.bf16.mxu0 0
        %1378 = vmatpush1.bf16.msra.mxu0 0
        %1379 = vmatprep.subr.bf16.mxu0 0
        %1380 = vmatpush1.bf16.msra.mxu0 0
        %1381 = vmatprep.subr.bf16.mxu0 0
        %1382 = vmatpush1.bf16.msra.mxu0 0
        %1383 = vmatprep.subr.bf16.mxu0 0
        %1384 = vmatpush1.bf16.msra.mxu0 0
        %1385 = vmatprep.subr.bf16.mxu0 0
        %1386 = vmatpush1.bf16.msra.mxu0 0
        %1387 = vmatprep.mubr.bf16.mxu0 0
        %1388 = vmatmul.mubr.bf16.gmra.mrb[0].mxu0 %v1353
        %v1389 = vpop.f32.mrb[0].mxu0
        %v1390 = vadd.f32 0.0, %v1389
        %v1391 = vpop.f32.mrb[0].mxu0
        %v1392 = vpop.f32.mrb[0].mxu0
        %v1393 = vpop.f32.mrb[0].mxu0
        %1394 = vdwg.mxu0
        %v1399 = vunpack.c.l.b16 %v1273
        %v1400 = vunpack.c.l.b16 %v1274
        %v1401 = vunpack.c.l.b16 %v1275
        %v1402 = vunpack.c.l.b16 %v1276
        %v1403 = vpack.c.b16 %v1400, %v1399
        %v1404 = vpack.c.b16 %v1402, %v1401
        %v1408 = vsel %vm1082, %v1337, 0
        %1410 = vmatprep.subr.bf16.mxu0 0
        %1411 = vmatpush1.bf16.msra.mxu0 %v1403
        %1412 = vmatprep.subr.bf16.mxu0 0
        %1413 = vmatpush1.bf16.msra.mxu0 %v1404
        %1414 = vmatprep.subr.bf16.mxu0 0
        %1415 = vmatpush1.bf16.msra.mxu0 0
        %1416 = vmatprep.subr.bf16.mxu0 0
        %1417 = vmatpush1.bf16.msra.mxu0 0
        %1418 = vmatprep.subr.bf16.mxu0 0
        %1419 = vmatpush1.bf16.msra.mxu0 0
        %1420 = vmatprep.subr.bf16.mxu0 0
        %1421 = vmatpush1.bf16.msra.mxu0 0
        %1422 = vmatprep.subr.bf16.mxu0 0
        %1423 = vmatpush1.bf16.msra.mxu0 0
        %1424 = vmatprep.subr.bf16.mxu0 0
        %1425 = vmatpush1.bf16.msra.mxu0 0
        %1426 = vmatprep.subr.bf16.mxu0 0
        %1427 = vmatpush1.bf16.msra.mxu0 0
        %1428 = vmatprep.subr.bf16.mxu0 0
        %1429 = vmatpush1.bf16.msra.mxu0 0
        %1430 = vmatprep.subr.bf16.mxu0 0
        %1431 = vmatpush1.bf16.msra.mxu0 0
        %1432 = vmatprep.subr.bf16.mxu0 0
        %1433 = vmatpush1.bf16.msra.mxu0 0
        %1434 = vmatprep.subr.bf16.mxu0 0
        %1435 = vmatpush1.bf16.msra.mxu0 0
        %1436 = vmatprep.subr.bf16.mxu0 0
        %1437 = vmatpush1.bf16.msra.mxu0 0
        %1438 = vmatprep.subr.bf16.mxu0 0
        %1439 = vmatpush1.bf16.msra.mxu0 0
        %1440 = vmatprep.subr.bf16.mxu0 0
        %1441 = vmatpush1.bf16.msra.mxu0 0
        %1442 = vmatprep.mubr.bf16.mxu0 0
        %1443 = vmatmul.mubr.bf16.gmra.mrb[0].mxu0 %v1408
        %v1444 = vpop.f32.mrb[0].mxu0
        %v1445 = vadd.f32 %v1390, %v1444
        %v1446 = vpop.f32.mrb[0].mxu0
        %v1447 = vpop.f32.mrb[0].mxu0
        %v1448 = vpop.f32.mrb[0].mxu0
        %1449 = vdwg.mxu0
        %1451 = vrot.lane.b32.xlu0 %v1265, 96
        %v1452 = vpop.permute.xlu0 %1451
        %v1454 = vsel %vm1082, %v1255, 0
        %v1457 = vsel %vm1082, %v1452, 0
        %1459 = vmatprep.subr.bf16.mxu0 0
        %1460 = vmatpush1.bf16.xpose.msra.mxu0 %v1457
        %1461 = vmatprep.subr.bf16.mxu0 0
        %1462 = vmatpush1.bf16.xpose.msra.mxu0 0
        %1463 = vmatprep.subr.bf16.mxu0 0
        %1464 = vmatpush1.bf16.xpose.msra.mxu0 0
        %1465 = vmatprep.subr.bf16.mxu0 0
        %1466 = vmatpush1.bf16.xpose.msra.mxu0 0
        %1467 = vmatprep.subr.bf16.mxu0 0
        %1468 = vmatpush1.bf16.xpose.msra.mxu0 0
        %1469 = vmatprep.subr.bf16.mxu0 0
        %1470 = vmatpush1.bf16.xpose.msra.mxu0 0
        %1471 = vmatprep.subr.bf16.mxu0 0
        %1472 = vmatpush1.bf16.xpose.msra.mxu0 0
        %1473 = vmatprep.subr.bf16.mxu0 0
        %1474 = vmatpush1.bf16.xpose.msra.mxu0 0
        %1475 = vmatprep.subr.bf16.mxu0 0
        %1476 = vmatpush1.bf16.xpose.msra.mxu0 0
        %1477 = vmatprep.subr.bf16.mxu0 0
        %1478 = vmatpush1.bf16.xpose.msra.mxu0 0
        %1479 = vmatprep.subr.bf16.mxu0 0
        %1480 = vmatpush1.bf16.xpose.msra.mxu0 0
        %1481 = vmatprep.subr.bf16.mxu0 0
        %1482 = vmatpush1.bf16.xpose.msra.mxu0 0
        %1483 = vmatprep.subr.bf16.mxu0 0
        %1484 = vmatpush1.bf16.xpose.msra.mxu0 0
        %1485 = vmatprep.subr.bf16.mxu0 0
        %1486 = vmatpush1.bf16.xpose.msra.mxu0 0
        %1487 = vmatprep.subr.bf16.mxu0 0
        %1488 = vmatpush1.bf16.xpose.msra.mxu0 0
        %1489 = vmatprep.subr.bf16.mxu0 0
        %1490 = vmatpush1.bf16.xpose.msra.mxu0 0
        %1491 = vmatprep.mubr.bf16.mxu0 0
        %1492 = vmatmul.mubr.bf16.gmra.mrb[0].mxu0 %v1454
        %v1493 = vpop.f32.mrb[0].mxu0
        %v1494 = vadd.f32 %v1445, %v1493
        %v1495 = vpop.f32.mrb[0].mxu0
        %v1496 = vpop.f32.mrb[0].mxu0
        %v1497 = vpop.f32.mrb[0].mxu0
        %1498 = vdwg.mxu0
        %v1499 = vmul.f32 %v1494, 0.17677669
        %v1500 = vsel %vm1074, -65000.0, %v1499
        %v1501 = vmax.f32 %v1500, -65000.0
        %v1502 = vmin.f32 %v1501, 65000.0
        %v1503 = vsel %vm1076, %v1502, -inf
        %1504 = vmax.xlane.f32.xlu0 %v1503
        %v1505 = vpop.xlane.xlu0 %1504
        %v1506 = vsub.f32 %v1502, %v1505
        %v1507 = vmul.f32 %v1506, 1.442695
        %v1508 = vpow.pop %v1507
        %v1509 = vsel %vm1076, %v1508, 0.0
        %1510 = vadd.xlane.f32.xlu0 %v1509
        %v1511 = vpop.xlane.xlu0 %1510
        %v1512 = vrcp.pop %v1511
        %v1513 = vmul.f32 %v1508, %v1512
        %v1514 = vmul.f32 %v1513, %v1079
        %v1515 = vpack.c.bf16 %v1514, %v1514
        %v1517 = vsel %vm1076, %v1515, 0
        %vm1519 = vcmask 1043456
        %v1521 = vsel %vm1519, %v1266, 0
        %1523 = vmatprep.subr.bf16.mxu0 0
        %1524 = vmatpush1.bf16.msra.mxu0 %v1521
        %1525 = vmatprep.subr.bf16.mxu0 0
        %1526 = vmatpush1.bf16.msra.mxu0 0
        %1527 = vmatprep.subr.bf16.mxu0 0
        %1528 = vmatpush1.bf16.msra.mxu0 0
        %1529 = vmatprep.subr.bf16.mxu0 0
        %1530 = vmatpush1.bf16.msra.mxu0 0
        %1531 = vmatprep.subr.bf16.mxu0 0
        %1532 = vmatpush1.bf16.msra.mxu0 0
        %1533 = vmatprep.subr.bf16.mxu0 0
        %1534 = vmatpush1.bf16.msra.mxu0 0
        %1535 = vmatprep.subr.bf16.mxu0 0
        %1536 = vmatpush1.bf16.msra.mxu0 0
        %1537 = vmatprep.subr.bf16.mxu0 0
        %1538 = vmatpush1.bf16.msra.mxu0 0
        %1539 = vmatprep.subr.bf16.mxu0 0
        %1540 = vmatpush1.bf16.msra.mxu0 0
        %1541 = vmatprep.subr.bf16.mxu0 0
        %1542 = vmatpush1.bf16.msra.mxu0 0
        %1543 = vmatprep.subr.bf16.mxu0 0
        %1544 = vmatpush1.bf16.msra.mxu0 0
        %1545 = vmatprep.subr.bf16.mxu0 0
        %1546 = vmatpush1.bf16.msra.mxu0 0
        %1547 = vmatprep.subr.bf16.mxu0 0
        %1548 = vmatpush1.bf16.msra.mxu0 0
        %1549 = vmatprep.subr.bf16.mxu0 0
        %1550 = vmatpush1.bf16.msra.mxu0 0
        %1551 = vmatprep.subr.bf16.mxu0 0
        %1552 = vmatpush1.bf16.msra.mxu0 0
        %1553 = vmatprep.subr.bf16.mxu0 0
        %1554 = vmatpush1.bf16.msra.mxu0 0
        %1555 = vmatprep.mubr.bf16.mxu0 0
        %1556 = vmatmul.mubr.bf16.gmra.mrb[0].mxu0 %v1517
        %v1557 = vpop.f32.mrb[0].mxu0
        %v1558 = vadd.f32 0.0, %v1557
        %v1559 = vpop.f32.mrb[0].mxu0
        %v1560 = vpop.f32.mrb[0].mxu0
        %v1561 = vpop.f32.mrb[0].mxu0
        %1562 = vdwg.mxu0
        %1563 = vst.msk [vmem:[#allocation2] sm:$0xff] %vm1082, %v1558
        %v1564 = vld [vmem:[#allocation2] sm:$0xff]
        %v1565 = vpack.c.bf16 %v1564, %v1564
        %v1566 = vld [vmem:[#allocation18] sm:$0xf]
        %v1567 = vld [vmem:[#allocation18 + $0x4] sm:$0xf]
        %v1568 = vld [vmem:[#allocation18 + $0x8] sm:$0xf]
        %v1569 = vld [vmem:[#allocation18 + $0xc] sm:$0xf]
        %v1574 = vunpack.c.l.b16 %v1566
        %v1575 = vunpack.c.l.b16 %v1567
        %v1576 = vunpack.c.l.b16 %v1568
        %v1577 = vunpack.c.l.b16 %v1569
        %v1578 = vpack.c.b16 %v1575, %v1574
        %v1579 = vpack.c.b16 %v1577, %v1576
        %v1583 = vsel %vm1082, %v1565, 0
        %1585 = vmatprep.subr.bf16.mxu0 0
        %1586 = vmatpush1.bf16.msra.mxu0 %v1578
        %1587 = vmatprep.subr.bf16.mxu0 0
        %1588 = vmatpush1.bf16.msra.mxu0 %v1579
        %1589 = vmatprep.subr.bf16.mxu0 0
        %1590 = vmatpush1.bf16.msra.mxu0 0
        %1591 = vmatprep.subr.bf16.mxu0 0
        %1592 = vmatpush1.bf16.msra.mxu0 0
        %1593 = vmatprep.subr.bf16.mxu0 0
        %1594 = vmatpush1.bf16.msra.mxu0 0
        %1595 = vmatprep.subr.bf16.mxu0 0
        %1596 = vmatpush1.bf16.msra.mxu0 0
        %1597 = vmatprep.subr.bf16.mxu0 0
        %1598 = vmatpush1.bf16.msra.mxu0 0
        %1599 = vmatprep.subr.bf16.mxu0 0
        %1600 = vmatpush1.bf16.msra.mxu0 0
        %1601 = vmatprep.subr.bf16.mxu0 0
        %1602 = vmatpush1.bf16.msra.mxu0 0
        %1603 = vmatprep.subr.bf16.mxu0 0
        %1604 = vmatpush1.bf16.msra.mxu0 0
        %1605 = vmatprep.subr.bf16.mxu0 0
        %1606 = vmatpush1.bf16.msra.mxu0 0
        %1607 = vmatprep.subr.bf16.mxu0 0
        %1608 = vmatpush1.bf16.msra.mxu0 0
        %1609 = vmatprep.subr.bf16.mxu0 0
        %1610 = vmatpush1.bf16.msra.mxu0 0
        %1611 = vmatprep.subr.bf16.mxu0 0
        %1612 = vmatpush1.bf16.msra.mxu0 0
        %1613 = vmatprep.subr.bf16.mxu0 0
        %1614 = vmatpush1.bf16.msra.mxu0 0
        %1615 = vmatprep.subr.bf16.mxu0 0
        %1616 = vmatpush1.bf16.msra.mxu0 0
        %1617 = vmatprep.mubr.bf16.mxu0 0
        %1618 = vmatmul.mubr.bf16.gmra.mrb[0].mxu0 %v1583
        %v1619 = vpop.f32.mrb[0].mxu0
        %v1620 = vadd.f32 0.0, %v1619
        %v1621 = vpop.f32.mrb[0].mxu0
        %v1622 = vpop.f32.mrb[0].mxu0
        %v1623 = vpop.f32.mrb[0].mxu0
        %1624 = vdwg.mxu0
        %v1625 = vmax.f32 %v1620, 0.0
        %v1626 = vld [vmem:[%s17] sm:$0xff]
        %v1627 = vld [vmem:[%s17 + $0x8] sm:$0xff]
        %v1628 = vld [vmem:[%s17 + $0x10] sm:$0xff]
        %v1629 = vld [vmem:[%s17 + $0x18] sm:$0xff]
        %v1630 = vld [vmem:[#allocation20] sm:$0xf]
        %v1631 = vld [vmem:[#allocation20 + $0x4] sm:$0xf]
        %v1632 = vld [vmem:[#allocation20 + $0x8] sm:$0xf]
        %v1633 = vld [vmem:[#allocation20 + $0xc] sm:$0xf]
        %v1634 = vld [vmem:[#allocation21] sm:$0x1]
        %v1635 = vpack.c.bf16 %v1625, %v1625
        %v1640 = vunpack.c.l.b16 %v1626
        %v1641 = vunpack.c.h.b16 %v1626
        %v1642 = vunpack.c.l.b16 %v1627
        %v1643 = vunpack.c.h.b16 %v1627
        %v1644 = vunpack.c.l.b16 %v1628
        %v1645 = vunpack.c.h.b16 %v1628
        %v1646 = vunpack.c.l.b16 %v1629
        %v1647 = vunpack.c.h.b16 %v1629
        %v1648 = vpack.c.b16 %v1642, %v1640
        %v1649 = vpack.c.b16 %v1643, %v1641
        %v1650 = vpack.c.b16 %v1646, %v1644
        %v1651 = vpack.c.b16 %v1647, %v1645
        %v1657 = vsel %vm1082, %v1635, 0
        %1659 = vmatprep.subr.bf16.mxu0 %v1649
        %1660 = vmatpush1.bf16.msra.mxu0 %v1648
        %1661 = vmatprep.subr.bf16.mxu0 %v1651
        %1662 = vmatpush1.bf16.msra.mxu0 %v1650
        %1663 = vmatprep.subr.bf16.mxu0 0
        %1664 = vmatpush1.bf16.msra.mxu0 0
        %1665 = vmatprep.subr.bf16.mxu0 0
        %1666 = vmatpush1.bf16.msra.mxu0 0
        %1667 = vmatprep.subr.bf16.mxu0 0
        %1668 = vmatpush1.bf16.msra.mxu0 0
        %1669 = vmatprep.subr.bf16.mxu0 0
        %1670 = vmatpush1.bf16.msra.mxu0 0
        %1671 = vmatprep.subr.bf16.mxu0 0
        %1672 = vmatpush1.bf16.msra.mxu0 0
        %1673 = vmatprep.subr.bf16.mxu0 0
        %1674 = vmatpush1.bf16.msra.mxu0 0
        %1675 = vmatprep.subr.bf16.mxu0 0
        %1676 = vmatpush1.bf16.msra.mxu0 0
        %1677 = vmatprep.subr.bf16.mxu0 0
        %1678 = vmatpush1.bf16.msra.mxu0 0
        %1679 = vmatprep.subr.bf16.mxu0 0
        %1680 = vmatpush1.bf16.msra.mxu0 0
        %1681 = vmatprep.subr.bf16.mxu0 0
        %1682 = vmatpush1.bf16.msra.mxu0 0
        %1683 = vmatprep.subr.bf16.mxu0 0
        %1684 = vmatpush1.bf16.msra.mxu0 0
        %1685 = vmatprep.subr.bf16.mxu0 0
        %1686 = vmatpush1.bf16.msra.mxu0 0
        %1687 = vmatprep.subr.bf16.mxu0 0
        %1688 = vmatpush1.bf16.msra.mxu0 0
        %1689 = vmatprep.subr.bf16.mxu0 0
        %1690 = vmatpush1.bf16.msra.mxu0 0
        %1691 = vmatprep.mubr.bf16.mxu0 0
        %1692 = vmatmul.mubr.bf16.gmra.mrb[0].mxu0 %v1657
        %v1693 = vpop.f32.mrb[0].mxu0
        %v1694 = vadd.f32 0.0, %v1693
        %v1695 = vpop.f32.mrb[0].mxu0
        %v1696 = vadd.f32 0.0, %v1695
        %v1697 = vpop.f32.mrb[0].mxu0
        %v1698 = vpop.f32.mrb[0].mxu0
        %1699 = vdwg.mxu0
        %1701 = vrot.lane.b32.xlu0 %v1694, 32
        %v1702 = vpop.permute.xlu0 %1701
        %v1704 = vadd.f32 %v1694, %v1702
        %v1705 = vxor.u32 %v1704, 2147483648
        %v1706 = vmul.f32 %v1705, 1.442695
        %v1707 = vpow.pop %v1706
        %v1708 = vadd.f32 %v1707, 1.0
        %v1709 = vrcp.pop %v1708
        %v1710 = vmul.f32 1.0, %v1709
        %1712 = vrot.lane.b32.xlu0 %v1696, 32
        %v1713 = vpop.permute.xlu0 %1712
        %v1715 = vadd.f32 %v1694, %v1713
        %v1717 = vlaneseq
        %v1718 = vshrl.u32 %v1717, 7
        %v1719 = vsub.s32 0, %v1718
        %v1720 = vrot.slane %v1634, %v1719
        %1721 = vrot.lane.b32.xlu0 %v1720, 32
        %v1722 = vpop.permute.xlu0 %1721
        %v1724 = vsub.f32 %v1715, %v1722
        %v1725 = vxor.u32 %v1724, 2147483648
        %v1726 = vmul.f32 %v1725, 1.442695
        %v1727 = vpow.pop %v1726
        %v1728 = vadd.f32 %v1727, 1.0
        %v1729 = vrcp.pop %v1728
        %v1730 = vmul.f32 1.0, %v1729
        %v1731 = vmul.f32 %v1710, %v1052
        %v1732 = vpack.c.bf16 %v1731, %v1731
        %v1737 = vunpack.c.l.b16 %v1630
        %v1738 = vunpack.c.l.b16 %v1631
        %v1739 = vunpack.c.l.b16 %v1632
        %v1740 = vunpack.c.l.b16 %v1633
        %v1741 = vpack.c.b16 %v1738, %v1737
        %v1742 = vpack.c.b16 %v1740, %v1739
        %v1746 = vsel %vm1082, %v1732, 0
        %1748 = vmatprep.subr.bf16.mxu0 0
        %1749 = vmatpush1.bf16.msra.mxu0 %v1741
        %1750 = vmatprep.subr.bf16.mxu0 0
        %1751 = vmatpush1.bf16.msra.mxu0 %v1742
        %1752 = vmatprep.subr.bf16.mxu0 0
        %1753 = vmatpush1.bf16.msra.mxu0 0
        %1754 = vmatprep.subr.bf16.mxu0 0
        %1755 = vmatpush1.bf16.msra.mxu0 0
        %1756 = vmatprep.subr.bf16.mxu0 0
        %1757 = vmatpush1.bf16.msra.mxu0 0
        %1758 = vmatprep.subr.bf16.mxu0 0
        %1759 = vmatpush1.bf16.msra.mxu0 0
        %1760 = vmatprep.subr.bf16.mxu0 0
        %1761 = vmatpush1.bf16.msra.mxu0 0
        %1762 = vmatprep.subr.bf16.mxu0 0
        %1763 = vmatpush1.bf16.msra.mxu0 0
        %1764 = vmatprep.subr.bf16.mxu0 0
        %1765 = vmatpush1.bf16.msra.mxu0 0
        %1766 = vmatprep.subr.bf16.mxu0 0
        %1767 = vmatpush1.bf16.msra.mxu0 0
        %1768 = vmatprep.subr.bf16.mxu0 0
        %1769 = vmatpush1.bf16.msra.mxu0 0
        %1770 = vmatprep.subr.bf16.mxu0 0
        %1771 = vmatpush1.bf16.msra.mxu0 0
        %1772 = vmatprep.subr.bf16.mxu0 0
        %1773 = vmatpush1.bf16.msra.mxu0 0
        %1774 = vmatprep.subr.bf16.mxu0 0
        %1775 = vmatpush1.bf16.msra.mxu0 0
        %1776 = vmatprep.subr.bf16.mxu0 0
        %1777 = vmatpush1.bf16.msra.mxu0 0
        %1778 = vmatprep.subr.bf16.mxu0 0
        %1779 = vmatpush1.bf16.msra.mxu0 0
        %1780 = vmatprep.mubr.bf16.mxu0 0
        %1781 = vmatmul.mubr.bf16.gmra.mrb[0].mxu0 %v1746
        %v1782 = vpop.f32.mrb[0].mxu0
        %v1783 = vadd.f32 0.0, %v1782
        %v1784 = vpop.f32.mrb[0].mxu0
        %v1785 = vpop.f32.mrb[0].mxu0
        %v1786 = vpop.f32.mrb[0].mxu0
        %1787 = vdwg.mxu0
        %1789 = vrot.lane.b32.xlu0 %v1783, 64
        %v1790 = vpop.permute.xlu0 %1789
        %v1792 = vadd.f32 %v1694, %v1790
        %v1793 = vtanh.pop %v1792
        %v1794 = vsub.f32 1.0, %v1730
        %1796 = vrot.lane.b32.xlu0 %v1052, 32
        %v1797 = vpop.permute.xlu0 %1796
        %v1799 = vmul.f32 %v1794, %v1797
        %1801 = vrot.lane.b32.xlu0 %v1793, 96
        %v1802 = vpop.permute.xlu0 %1801
        %v1804 = vmul.f32 %v1730, %v1802
        %v1805 = vadd.f32 %v1799, %v1804
        %v1806 = vld [vmem:[#allocation23] sm:$0x1]
        %v1807 = vld [vmem:[#allocation24] sm:$0x1]
        %1809 = vrot.lane.b32.xlu0 %v1805, 96
        %v1810 = vpop.permute.xlu0 %1809
        %v1812 = vsel %vm1082, %v1810, 0.0
        %1813 = vadd.xlane.f32.xlu0 %v1812
        %v1814 = vpop.xlane.xlu0 %1813
        %v1815 = vmul.f32 %v1814, %v1086
        %v1816 = vsub.f32 %v1805, %v1815
        %v1817 = vmul.f32 %v1816, %v1816
        %1819 = vrot.lane.b32.xlu0 %v1817, 96
        %v1820 = vpop.permute.xlu0 %1819
        %v1822 = vsel %vm1082, %v1820, 0.0
        %1823 = vadd.xlane.f32.xlu0 %v1822
        %v1824 = vpop.xlane.xlu0 %1823
        %v1825 = vmul.f32 %v1824, %v1086
        %v1826 = vadd.f32 %v1825, 1e-05
        %v1827 = vrsqrt.pop %v1826
        %v1828 = vmul.f32 %v1816, %v1827
        %v1830 = vlaneseq
        %v1831 = vshrl.u32 %v1830, 7
        %v1832 = vsub.s32 0, %v1831
        %v1833 = vrot.slane %v1806, %v1832
        %1834 = vrot.lane.b32.xlu0 %v1833, 32
        %v1835 = vpop.permute.xlu0 %1834
        %v1837 = vmul.f32 %v1828, %v1835
        %v1839 = vlaneseq
        %v1840 = vshrl.u32 %v1839, 7
        %v1841 = vsub.s32 0, %v1840
        %v1842 = vrot.slane %v1807, %v1841
        %1843 = vrot.lane.b32.xlu0 %v1842, 32
        %v1844 = vpop.permute.xlu0 %1843
        %v1846 = vadd.f32 %v1837, %v1844
        %v1847 = vpack.c.bf16 %v1846, %v1846
        %v1848 = vld [vmem:[%s22] sm:$0xf]
        %v1849 = vld [vmem:[%s22 + $0x4] sm:$0xf]
        %v1850 = vld [vmem:[%s22 + $0x8] sm:$0xf]
        %v1851 = vld [vmem:[%s22 + $0xc] sm:$0xf]
        %v1852 = vld [vmem:[#allocation26] sm:$0x1]
        %v1854 = vlaneseq
        %v1855 = vshrl.u32 %v1854, 7
        %v1856 = vsub.s32 0, %v1855
        %v1857 = vrot.slane %v1852, %v1856
        %1860 = vrot.lane.b32.xlu0 %v1847, 96
        %v1861 = vpop.permute.xlu0 %1860
        %v1866 = vunpack.c.l.b16 %v1848
        %v1867 = vunpack.c.l.b16 %v1849
        %v1868 = vunpack.c.l.b16 %v1850
        %v1869 = vunpack.c.l.b16 %v1851
        %v1870 = vpack.c.b16 %v1867, %v1866
        %v1871 = vpack.c.b16 %v1869, %v1868
        %v1875 = vsel %vm1082, %v1861, 0
        %1877 = vmatprep.subr.bf16.mxu0 0
        %1878 = vmatpush1.bf16.msra.mxu0 %v1870
        %1879 = vmatprep.subr.bf16.mxu0 0
        %1880 = vmatpush1.bf16.msra.mxu0 %v1871
        %1881 = vmatprep.subr.bf16.mxu0 0
        %1882 = vmatpush1.bf16.msra.mxu0 0
        %1883 = vmatprep.subr.bf16.mxu0 0
        %1884 = vmatpush1.bf16.msra.mxu0 0
        %1885 = vmatprep.subr.bf16.mxu0 0
        %1886 = vmatpush1.bf16.msra.mxu0 0
        %1887 = vmatprep.subr.bf16.mxu0 0
        %1888 = vmatpush1.bf16.msra.mxu0 0
        %1889 = vmatprep.subr.bf16.mxu0 0
        %1890 = vmatpush1.bf16.msra.mxu0 0
        %1891 = vmatprep.subr.bf16.mxu0 0
        %1892 = vmatpush1.bf16.msra.mxu0 0
        %1893 = vmatprep.subr.bf16.mxu0 0
        %1894 = vmatpush1.bf16.msra.mxu0 0
        %1895 = vmatprep.subr.bf16.mxu0 0
        %1896 = vmatpush1.bf16.msra.mxu0 0
        %1897 = vmatprep.subr.bf16.mxu0 0
        %1898 = vmatpush1.bf16.msra.mxu0 0
        %1899 = vmatprep.subr.bf16.mxu0 0
        %1900 = vmatpush1.bf16.msra.mxu0 0
        %1901 = vmatprep.subr.bf16.mxu0 0
        %1902 = vmatpush1.bf16.msra.mxu0 0
        %1903 = vmatprep.subr.bf16.mxu0 0
        %1904 = vmatpush1.bf16.msra.mxu0 0
        %1905 = vmatprep.subr.bf16.mxu0 0
        %1906 = vmatpush1.bf16.msra.mxu0 0
        %1907 = vmatprep.subr.bf16.mxu0 0
        %1908 = vmatpush1.bf16.msra.mxu0 0
        %1909 = vmatprep.mubr.bf16.mxu0 0
        %1910 = vmatmul.mubr.bf16.gmra.mrb[0].mxu0 %v1875
        %v1911 = vpop.f32.mrb[0].mxu0
        %v1912 = vadd.f32 %v1857, %v1911
        %v1913 = vpop.f32.mrb[0].mxu0
        %v1914 = vpop.f32.mrb[0].mxu0
        %v1915 = vpop.f32.mrb[0].mxu0
        %1916 = vdwg.mxu0
        %v1917 = vmax.f32 %v1912, 0.0
        %v1918 = vld [vmem:[%s24] sm:$0xff]
        %v1919 = vld [vmem:[%s24 + $0x8] sm:$0xff]
        %v1920 = vld [vmem:[%s24 + $0x10] sm:$0xff]
        %v1921 = vld [vmem:[%s24 + $0x18] sm:$0xff]
        %v1922 = vld [vmem:[%s25] sm:$0xf]
        %v1923 = vld [vmem:[%s25 + $0x4] sm:$0xf]
        %v1924 = vld [vmem:[%s25 + $0x8] sm:$0xf]
        %v1925 = vld [vmem:[%s25 + $0xc] sm:$0xf]
        %v1926 = vld [vmem:[%s26] sm:$0x1]
        %v1927 = vpack.c.bf16 %v1917, %v1917
        %v1932 = vunpack.c.l.b16 %v1918
        %v1933 = vunpack.c.h.b16 %v1918
        %v1934 = vunpack.c.l.b16 %v1919
        %v1935 = vunpack.c.h.b16 %v1919
        %v1936 = vunpack.c.l.b16 %v1920
        %v1937 = vunpack.c.h.b16 %v1920
        %v1938 = vunpack.c.l.b16 %v1921
        %v1939 = vunpack.c.h.b16 %v1921
        %v1940 = vpack.c.b16 %v1934, %v1932
        %v1941 = vpack.c.b16 %v1935, %v1933
        %v1942 = vpack.c.b16 %v1938, %v1936
        %v1943 = vpack.c.b16 %v1939, %v1937
        %v1949 = vsel %vm1082, %v1927, 0
        %1951 = vmatprep.subr.bf16.mxu0 %v1941
        %1952 = vmatpush1.bf16.msra.mxu0 %v1940
        %1953 = vmatprep.subr.bf16.mxu0 %v1943
        %1954 = vmatpush1.bf16.msra.mxu0 %v1942
        %1955 = vmatprep.subr.bf16.mxu0 0
        %1956 = vmatpush1.bf16.msra.mxu0 0
        %1957 = vmatprep.subr.bf16.mxu0 0
        %1958 = vmatpush1.bf16.msra.mxu0 0
        %1959 = vmatprep.subr.bf16.mxu0 0
        %1960 = vmatpush1.bf16.msra.mxu0 0
        %1961 = vmatprep.subr.bf16.mxu0 0
        %1962 = vmatpush1.bf16.msra.mxu0 0
        %1963 = vmatprep.subr.bf16.mxu0 0
        %1964 = vmatpush1.bf16.msra.mxu0 0
        %1965 = vmatprep.subr.bf16.mxu0 0
        %1966 = vmatpush1.bf16.msra.mxu0 0
        %1967 = vmatprep.subr.bf16.mxu0 0
        %1968 = vmatpush1.bf16.msra.mxu0 0
        %1969 = vmatprep.subr.bf16.mxu0 0
        %1970 = vmatpush1.bf16.msra.mxu0 0
        %1971 = vmatprep.subr.bf16.mxu0 0
        %1972 = vmatpush1.bf16.msra.mxu0 0
        %1973 = vmatprep.subr.bf16.mxu0 0
        %1974 = vmatpush1.bf16.msra.mxu0 0
        %1975 = vmatprep.subr.bf16.mxu0 0
        %1976 = vmatpush1.bf16.msra.mxu0 0
        %1977 = vmatprep.subr.bf16.mxu0 0
        %1978 = vmatpush1.bf16.msra.mxu0 0
        %1979 = vmatprep.subr.bf16.mxu0 0
        %1980 = vmatpush1.bf16.msra.mxu0 0
        %1981 = vmatprep.subr.bf16.mxu0 0
        %1982 = vmatpush1.bf16.msra.mxu0 0
        %1983 = vmatprep.mubr.bf16.mxu0 0
        %1984 = vmatmul.mubr.bf16.gmra.mrb[0].mxu0 %v1949
        %v1985 = vpop.f32.mrb[0].mxu0
        %v1986 = vadd.f32 0.0, %v1985
        %v1987 = vpop.f32.mrb[0].mxu0
        %v1988 = vadd.f32 0.0, %v1987
        %v1989 = vpop.f32.mrb[0].mxu0
        %v1990 = vpop.f32.mrb[0].mxu0
        %1991 = vdwg.mxu0
        %1993 = vrot.lane.b32.xlu0 %v1986, 32
        %v1994 = vpop.permute.xlu0 %1993
        %v1996 = vadd.f32 %v1986, %v1994
        %v1997 = vxor.u32 %v1996, 2147483648
        %v1998 = vmul.f32 %v1997, 1.442695
        %v1999 = vpow.pop %v1998
        %v2000 = vadd.f32 %v1999, 1.0
        %v2001 = vrcp.pop %v2000
        %v2002 = vmul.f32 1.0, %v2001
        %2004 = vrot.lane.b32.xlu0 %v1988, 32
        %v2005 = vpop.permute.xlu0 %2004
        %v2007 = vadd.f32 %v1986, %v2005
        %v2009 = vlaneseq
        %v2010 = vshrl.u32 %v2009, 7
        %v2011 = vsub.s32 0, %v2010
        %v2012 = vrot.slane %v1926, %v2011
        %2013 = vrot.lane.b32.xlu0 %v2012, 32
        %v2014 = vpop.permute.xlu0 %2013
        %v2016 = vsub.f32 %v2007, %v2014
        %v2017 = vxor.u32 %v2016, 2147483648
        %v2018 = vmul.f32 %v2017, 1.442695
        %v2019 = vpow.pop %v2018
        %v2020 = vadd.f32 %v2019, 1.0
        %v2021 = vrcp.pop %v2020
        %v2022 = vmul.f32 1.0, %v2021
        %v2023 = vmul.f32 %v2002, %v1810
        %v2024 = vpack.c.bf16 %v2023, %v2023
        %v2029 = vunpack.c.l.b16 %v1922
        %v2030 = vunpack.c.l.b16 %v1923
        %v2031 = vunpack.c.l.b16 %v1924
        %v2032 = vunpack.c.l.b16 %v1925
        %v2033 = vpack.c.b16 %v2030, %v2029
        %v2034 = vpack.c.b16 %v2032, %v2031
        %v2038 = vsel %vm1082, %v2024, 0
        %2040 = vmatprep.subr.bf16.mxu0 0
        %2041 = vmatpush1.bf16.msra.mxu0 %v2033
        %2042 = vmatprep.subr.bf16.mxu0 0
        %2043 = vmatpush1.bf16.msra.mxu0 %v2034
        %2044 = vmatprep.subr.bf16.mxu0 0
        %2045 = vmatpush1.bf16.msra.mxu0 0
        %2046 = vmatprep.subr.bf16.mxu0 0
        %2047 = vmatpush1.bf16.msra.mxu0 0
        %2048 = vmatprep.subr.bf16.mxu0 0
        %2049 = vmatpush1.bf16.msra.mxu0 0
        %2050 = vmatprep.subr.bf16.mxu0 0
        %2051 = vmatpush1.bf16.msra.mxu0 0
        %2052 = vmatprep.subr.bf16.mxu0 0
        %2053 = vmatpush1.bf16.msra.mxu0 0
        %2054 = vmatprep.subr.bf16.mxu0 0
        %2055 = vmatpush1.bf16.msra.mxu0 0
        %2056 = vmatprep.subr.bf16.mxu0 0
        %2057 = vmatpush1.bf16.msra.mxu0 0
        %2058 = vmatprep.subr.bf16.mxu0 0
        %2059 = vmatpush1.bf16.msra.mxu0 0
        %2060 = vmatprep.subr.bf16.mxu0 0
        %2061 = vmatpush1.bf16.msra.mxu0 0
        %2062 = vmatprep.subr.bf16.mxu0 0
        %2063 = vmatpush1.bf16.msra.mxu0 0
        %2064 = vmatprep.subr.bf16.mxu0 0
        %2065 = vmatpush1.bf16.msra.mxu0 0
        %2066 = vmatprep.subr.bf16.mxu0 0
        %2067 = vmatpush1.bf16.msra.mxu0 0
        %2068 = vmatprep.subr.bf16.mxu0 0
        %2069 = vmatpush1.bf16.msra.mxu0 0
        %2070 = vmatprep.subr.bf16.mxu0 0
        %2071 = vmatpush1.bf16.msra.mxu0 0
        %2072 = vmatprep.mubr.bf16.mxu0 0
        %2073 = vmatmul.mubr.bf16.gmra.mrb[0].mxu0 %v2038
        %v2074 = vpop.f32.mrb[0].mxu0
        %v2075 = vadd.f32 0.0, %v2074
        %v2076 = vpop.f32.mrb[0].mxu0
        %v2077 = vpop.f32.mrb[0].mxu0
        %v2078 = vpop.f32.mrb[0].mxu0
        %2079 = vdwg.mxu0
        %2081 = vrot.lane.b32.xlu0 %v2075, 64
        %v2082 = vpop.permute.xlu0 %2081
        %v2084 = vadd.f32 %v1986, %v2082
        %v2085 = vtanh.pop %v2084
        %v2086 = vsub.f32 1.0, %v2022
        %v2087 = vmul.f32 %v2086, %v1805
        %2089 = vrot.lane.b32.xlu0 %v2085, 96
        %v2090 = vpop.permute.xlu0 %2089
        %v2092 = vmul.f32 %v2022, %v2090
        %v2093 = vadd.f32 %v2087, %v2092
        %2095 = vrot.lane.b32.xlu0 %v2093, 96
        %v2096 = vpop.permute.xlu0 %2095
        %2098 = vst.msk [vmem:[%s1046] sm:$0xff] %vm1082, %v2096
        %s2099 = sand.u32 %s643, 1
        %s2100 = scalar_lea.sflag [#allocation5], %s2099
        %s2101 = sand.u32 %s643, 1
        %s2102 = smul.addr %s2101, 8
        %s2103 = scalar_lea.vmem [#allocation27], %s2102
        // Predicated region
        $region189: #{tpu_custom_call.1} parent=127 // pred_check
          %p2104 = pneg %p653
        $region190: #{tpu_custom_call.1} parent=127 // pred_check_branch
          %2106 = sbr.rel (%p2104) target = $region192
        $region191: #{tpu_custom_call.1} parent=127 // pred_region
          %s2108 = ssub.s32 128, 128
          %2109 = vsyncadd %s2100, %s2108
          %s2110 = smul.addr %s53, 128
          %s2111 = scalar_lea.hbm %s27, %s2110
          %s2113 = sshll.u32 %s2103, 4
          %s2114 = int_to_ptr.vmem [resolvable:$true] %s2113
          %2116 = dma.vmem_to_hbm [thread:$0]  %s2114, 128, %s2111, %s2100
        $region192: #{tpu_custom_call.1} parent=127 // pred_fallthru
          _
      $region128: #{tpu_custom_call.1} parent=5 // pred_fallthru
        _
      %p2117 = scmp.le.s32.totalorder 2, %s48
      // Predicated region
      $region193: #{tpu_custom_call.1} parent=5 // pred_check
        %p2118 = pneg %p2117
      $region194: #{tpu_custom_call.1} parent=5 // pred_check_branch
        %2120 = sbr.rel (%p2118) target = $region196
      $region195: #{tpu_custom_call.1} parent=5 // pred_region
        %s2121 = ssub.s32 %s48, 2
        // Predicated region
        $region197: #{tpu_custom_call.1} parent=195 // pred_check
          %p2122 = pneg %p659
        $region198: #{tpu_custom_call.1} parent=195 // pred_check_branch
          %2124 = sbr.rel (%p2122) target = $region200
        $region199: #{tpu_custom_call.1} parent=195 // pred_region
          %s2125 = sand.u32 %s644, 1
          %s2126 = scalar_lea.sflag [#allocation5], %s2125
          %s2127 = sand.u32 %s644, 1
          %s2128 = smul.addr %s2127, 8
          %s2129 = scalar_lea.vmem [#allocation27], %s2128
          %2130 = dma.done %s2126, 128
        $region200: #{tpu_custom_call.1} parent=195 // pred_fallthru
          _
      $region196: #{tpu_custom_call.1} parent=5 // pred_fallthru
        _
    $region6: #{tpu_custom_call.1} parent=1 // loop_footer
      %s52 = sadd.s32 1, %s48
    $region7: #{tpu_custom_call.1} parent=1 // loop_footer_branch
      %47 = sbr.rel target = $region3
    $region8: #{tpu_custom_call.1} parent=1 // loop_exit
      _
    %2131 = vsyncpa [#allocation4], 1
    %s2132 = scalar_lea.sflag [#allocation4], 1
    %2133 = vsyncpa %s2132, 1
    %2134 = vsyncpa [#allocation7], 1
    %s2135 = scalar_lea.sflag [#allocation7], 1
    %2136 = vsyncpa %s2135, 1
    %2137 = vsyncpa [#allocation10], 1
    %2138 = vsyncpa [#allocation13], 1
    %2139 = vsyncpa [#allocation16], 1
    %2140 = vsyncpa [#allocation19], 1
    %2141 = vsyncpa [#allocation22], 1
    %2142 = vsyncpa [#allocation25], 1
    %2143 = vsyncpa [#allocation5], 1
    %s2144 = scalar_lea.sflag [#allocation5], 1
    %2145 = vsyncpa %s2144, 1

</llo_original>
